<compile_context>
chip_gen: v6e
topology: v6e:2x2x1
jax: 0.10.0
libtpu: 0.0.40
codegen_flags: <defaults>
</compile_context>

<pallas_src>
import jax
import jax.numpy as jnp
from jax.experimental import pallas as pl
from jax.experimental.pallas import tpu as pltpu

IN_DIM = 28 * 28   # 784
HID_DIM = 500
HID_PAD = 512      # hidden dim padded to a multiple of 128 lanes
OUT_DIM = 10
TILE_B = 512       # batch tile (multiple of 8); big tiles amortize per-step cost


def _round_up(n, m):
    return (n + m - 1) // m * m


def prepare_params(w1, w2):
    """One-time parameter prep (hoisted out of the per-call path).

    w1: [500, 784], w2: [10, 500] (PyTorch nn.Linear layout).
    Returns w1t_pad [784, 512] and w2t_pad [512, 10], zero-padded on the
    hidden dim so the padding contributes exactly 0 to `out`.
    """
    w1 = jnp.asarray(w1, jnp.float32)
    w2 = jnp.asarray(w2, jnp.float32)
    w1t_pad = jnp.zeros((IN_DIM, HID_PAD), jnp.float32).at[:, :HID_DIM].set(w1.T)
    w2t_pad = jnp.zeros((HID_PAD, OUT_DIM), jnp.float32).at[:HID_DIM, :].set(w2.T)
    return w1t_pad, w2t_pad


def mlp_kernel(x_ref, w1t_ref, w2t_ref, a1_ref, a2_ref, out_ref):
    # x_ref: [tile_b, 784], w1t_ref: [784, 512], w2t_ref: [512, 10]
    x = x_ref[...]
    a1 = jnp.dot(x, w1t_ref[...], preferred_element_type=jnp.float32)   # [tb, 512]
    a2 = jnp.maximum(a1, 0.0)                                           # ReLU
    # Store the real 500-wide activations (padding cols 500..511 are exactly 0
    # for a2 and x@0 for a1, so they are simply dropped).
    a1_ref[...] = a1[:, :HID_DIM]
    a2_ref[...] = a2[:, :HID_DIM]
    # Padded rows of w2t are zero -> using the 512-wide a2 is exact.
    out_ref[...] = jnp.dot(a2, w2t_ref[...], preferred_element_type=jnp.float32)


def nn_forward(x, w1t_pad, w2t_pad):
    """x: [B, 784] f32; w1t_pad/w2t_pad from prepare_params.

    Returns (a1, a2, out) with shapes ([B,500], [B,500], [B,10]),
    matching NN.forward.
    """
    B = x.shape[0]
    tile_b = min(TILE_B, _round_up(B, 8))
    grid = (pl.cdiv(B, tile_b),)

    a1, a2, out = pl.pallas_call(
        mlp_kernel,
        out_shape=(
            jax.ShapeDtypeStruct((B, HID_DIM), jnp.float32),
            jax.ShapeDtypeStruct((B, HID_DIM), jnp.float32),
            jax.ShapeDtypeStruct((B, OUT_DIM), jnp.float32),
        ),
        grid=grid,
        in_specs=[
            # x: tiled along batch
            pl.BlockSpec((tile_b, IN_DIM), lambda i: (i, 0)),
            # weights: same block for every batch tile -> stay VMEM-resident
            pl.BlockSpec((IN_DIM, HID_PAD), lambda i: (0, 0)),
            pl.BlockSpec((HID_PAD, OUT_DIM), lambda i: (0, 0)),
        ],
        out_specs=(
            pl.BlockSpec((tile_b, HID_DIM), lambda i: (i, 0)),
            pl.BlockSpec((tile_b, HID_DIM), lambda i: (i, 0)),
            pl.BlockSpec((tile_b, OUT_DIM), lambda i: (i, 0)),
        ),
        compiler_params=pltpu.CompilerParams(
            dimension_semantics=("parallel",),   # shard batch tiles across TCs (v7x)
        ),
    )(x, w1t_pad, w2t_pad)
    return a1, a2, out


if __name__ == "__main__":
    key = jax.random.PRNGKey(0)
    kx, k1, k2 = jax.random.split(key, 3)

    B = 8  # small batch
    x = jax.random.normal(kx, (B, IN_DIM), dtype=jnp.float32)
    # Deterministic synthetic weights (PyTorch nn.Linear weight shapes).
    w1 = jax.random.normal(k1, (HID_DIM, IN_DIM), dtype=jnp.float32) * 0.02
    w2 = jax.random.normal(k2, (OUT_DIM, HID_DIM), dtype=jnp.float32) * 0.02

    # One-time parameter prep (transpose + pad) -- not in the per-call path.
    w1t_pad, w2t_pad = prepare_params(w1, w2)

    fwd = jax.jit(nn_forward)
    a1, a2, out = jax.block_until_ready(fwd(x, w1t_pad, w2t_pad))

    # Pure-JAX reference check.
    a1_ref = x @ w1.T
    a2_ref = jnp.maximum(a1_ref, 0.0)
    out_ref = a2_ref @ w2.T
    assert jnp.allclose(a1, a1_ref, atol=1e-4, rtol=1e-4)
    assert jnp.allclose(a2, a2_ref, atol=1e-4, rtol=1e-4)
    assert jnp.allclose(out, out_ref, atol=1e-4, rtol=1e-4)
    assert a1.shape == (B, HID_DIM) and a2.shape == (B, HID_DIM) and out.shape == (B, OUT_DIM)

    print("KERNEL_OK")
</pallas_src>

<mosaic_0001>
module attributes {stable_mosaic.version = 11 : i64} {
  func.func @mlp_kernel(%arg0: i32, %arg1: memref<8x784xf32, #tpu.memory_space<vmem>>, %arg2: memref<784x512xf32, #tpu.memory_space<vmem>>, %arg3: memref<512x10xf32, #tpu.memory_space<vmem>>, %arg4: memref<8x500xf32, #tpu.memory_space<vmem>>, %arg5: memref<8x500xf32, #tpu.memory_space<vmem>>, %arg6: memref<8x10xf32, #tpu.memory_space<vmem>>) attributes {dimension_semantics = [#tpu.dimension_semantics<parallel>], iteration_bounds = array<i64: 1>, scalar_prefetch = 0 : i64, scratch_operands = 0 : i64, tpu.core_type = #tpu.core_type<tc>, window_params = [{transform_indices = @transform_0, window_bounds = array<i64: 8, 784>}, {pipeline_mode = #tpu.pipeline_mode<synchronous>, transform_indices = @transform_1, window_bounds = array<i64: 784, 512>}, {pipeline_mode = #tpu.pipeline_mode<synchronous>, transform_indices = @transform_2, window_bounds = array<i64: 512, 10>}, {transform_indices = @transform_3, window_bounds = array<i64: 8, 500>}, {transform_indices = @transform_4, window_bounds = array<i64: 8, 500>}, {transform_indices = @transform_5, window_bounds = array<i64: 8, 10>}]} {
    %c0 = arith.constant 0 : index
    %c0_0 = arith.constant 0 : index
    %0 = vector.load %arg1[%c0, %c0_0] : memref<8x784xf32, #tpu.memory_space<vmem>>, vector<8x784xf32>
    %c0_1 = arith.constant 0 : index
    %c0_2 = arith.constant 0 : index
    %1 = vector.load %arg2[%c0_1, %c0_2] : memref<784x512xf32, #tpu.memory_space<vmem>>, vector<784x512xf32>
    %cst = arith.constant dense<0.000000e+00> : vector<8x512xf32>
    %2 = tpu.matmul %0, %1, %cst {dimension_numbers = #tpu.dot_dimension_numbers<[1], [0], [0], [1], [0, 0, 1, 1], [], []>} : vector<8x784xf32>, vector<784x512xf32>, vector<8x512xf32> -> vector<8x512xf32>
    %cst_3 = arith.constant 0.000000e+00 : f32
    %3 = vector.broadcast %cst_3 : f32 to vector<8x512xf32>
    %4 = arith.maximumf %2, %3 : vector<8x512xf32>
    %5 = vector.extract_strided_slice %2 {offsets = [0, 0], sizes = [8, 500], strides = [1, 1]} : vector<8x512xf32> to vector<8x500xf32>
    %c0_4 = arith.constant 0 : index
    %c0_5 = arith.constant 0 : index
    %6 = vector.load %arg4[%c0_4, %c0_5] : memref<8x500xf32, #tpu.memory_space<vmem>>, vector<8x500xf32>
    tpu.vector_store %arg4[%c0_4, %c0_5], %5 {strides = array<i32>} : memref<8x500xf32, #tpu.memory_space<vmem>>, vector<8x500xf32>,
    %7 = vector.extract_strided_slice %4 {offsets = [0, 0], sizes = [8, 500], strides = [1, 1]} : vector<8x512xf32> to vector<8x500xf32>
    %c0_6 = arith.constant 0 : index
    %c0_7 = arith.constant 0 : index
    %8 = vector.load %arg5[%c0_6, %c0_7] : memref<8x500xf32, #tpu.memory_space<vmem>>, vector<8x500xf32>
    tpu.vector_store %arg5[%c0_6, %c0_7], %7 {strides = array<i32>} : memref<8x500xf32, #tpu.memory_space<vmem>>, vector<8x500xf32>,
    %c0_8 = arith.constant 0 : index
    %c0_9 = arith.constant 0 : index
    %9 = vector.load %arg3[%c0_8, %c0_9] : memref<512x10xf32, #tpu.memory_space<vmem>>, vector<512x10xf32>
    %cst_10 = arith.constant dense<0.000000e+00> : vector<8x10xf32>
    %10 = tpu.matmul %4, %9, %cst_10 {dimension_numbers = #tpu.dot_dimension_numbers<[1], [0], [0], [1], [0, 0, 1, 1], [], []>} : vector<8x512xf32>, vector<512x10xf32>, vector<8x10xf32> -> vector<8x10xf32>
    %c0_11 = arith.constant 0 : index
    %c0_12 = arith.constant 0 : index
    %11 = vector.load %arg6[%c0_11, %c0_12] : memref<8x10xf32, #tpu.memory_space<vmem>>, vector<8x10xf32>
    tpu.vector_store %arg6[%c0_11, %c0_12], %10 {strides = array<i32>} : memref<8x10xf32, #tpu.memory_space<vmem>>, vector<8x10xf32>,
    return
  }
  func.func @transform_0(%arg0: i32) -> (i32, i32) {
    %c0_i32 = arith.constant 0 : i32
    %c0_i32_0 = arith.constant 0 : i32
    return %arg0, %c0_i32 : i32, i32
  }
  func.func @transform_1(%arg0: i32) -> (i32, i32) {
    %c0_i32 = arith.constant 0 : i32
    %c0_i32_0 = arith.constant 0 : i32
    %c0_i32_1 = arith.constant 0 : i32
    return %c0_i32, %c0_i32_0 : i32, i32
  }
  func.func @transform_2(%arg0: i32) -> (i32, i32) {
    %c0_i32 = arith.constant 0 : i32
    %c0_i32_0 = arith.constant 0 : i32
    %c0_i32_1 = arith.constant 0 : i32
    return %c0_i32, %c0_i32_0 : i32, i32
  }
  func.func @transform_3(%arg0: i32) -> (i32, i32) {
    %c0_i32 = arith.constant 0 : i32
    %c0_i32_0 = arith.constant 0 : i32
    return %arg0, %c0_i32 : i32, i32
  }
  func.func @transform_4(%arg0: i32) -> (i32, i32) {
    %c0_i32 = arith.constant 0 : i32
    %c0_i32_0 = arith.constant 0 : i32
    return %arg0, %c0_i32 : i32, i32
  }
  func.func @transform_5(%arg0: i32) -> (i32, i32) {
    %c0_i32 = arith.constant 0 : i32
    %c0_i32_0 = arith.constant 0 : i32
    return %arg0, %c0_i32 : i32, i32
  }
}

</mosaic_0001>

<llo_original>
// kernel: nn_forward.1
$region0: #{nn_forward.1}
  #allocation0 [shape = 'u32[]', space=smem, size = 0x4, offset = 0x4, fixed_abs, tag = 'smem constant byte address 0x4 - core index']
  #allocation1 [shape = 'u32[144,128]{1,0:T(1,128)}', space=vmem, size = 0x12000, scoped, tag = 'internal scratch']
  %s0 = inlined_call_operand.hbm [shape: f32[8,784], index: 0, kind: input, shape index: {}]
  %s1 = inlined_call_operand.hbm [shape: f32[784,512], index: 1, kind: input, shape index: {}]
  %s2 = inlined_call_operand.vmem [shape: f32[512,10], index: 2, kind: input, shape index: {}]
  %s3 = inlined_call_operand.hbm [shape: f32[8,500], index: 3, kind: output, shape index: {0}]
  %s4 = inlined_call_operand.hbm [shape: f32[8,500], index: 4, kind: output, shape index: {1}]
  %s5 = inlined_call_operand.hbm [shape: f32[8,10], index: 5, kind: output, shape index: {2}]
  %6 = xla_tuple %s3, %s4, %s5
  %s7 = sld [smem:[#allocation0]]
  $region46: #{nn_forward.1} parent=0
    _
  %s9 = ssub.s32 1, %s7
  %s10 = scalar_select 0, %s9, %s7
  $region1: #{nn_forward.1} parent=0
    #allocation2 [shape = 'u8[28672]{0}', space=vmem, size = 0x7000, scoped, tag = 'input window, operand 0, single buffered']
    #allocation3 [shape = 's32[1]{0}', space=sflag, size = 0x4, scoped, tag = 'scoped memory for nn_forward.1']
    #allocation4 [shape = 's32[1]{0}', space=sflag, size = 0x4, scoped, tag = 'scoped memory for nn_forward.1']
    #allocation5 [shape = 'u8[1605632]{0}', space=vmem, size = 0x188000, scoped, tag = 'input window, operand 1, single buffered']
    #allocation6 [shape = 's32[1]{0}', space=sflag, size = 0x4, scoped, tag = 'scoped memory for nn_forward.1']
    #allocation7 [shape = 'u8[16384]{0}', space=vmem, size = 0x4000, scoped, tag = 'output window, operand 0, single buffered']
    #allocation8 [shape = 'u8[16384]{0}', space=vmem, size = 0x4000, scoped, tag = 'output window, operand 1, single buffered']
    #allocation9 [shape = 's32[1]{0}', space=sflag, size = 0x4, scoped, tag = 'scoped memory for nn_forward.1']
    #allocation10 [shape = 'u8[4096]{0}', space=vmem, size = 0x1000, scoped, tag = 'output window, operand 2, single buffered']
    %11 = vsyncpa [#allocation3], 0
    %12 = vsyncpa [#allocation6], 0
    %13 = vsyncpa [#allocation4], 0
    %14 = vsyncpa [#allocation9], 0
    // Predicated region
    $region2: #{nn_forward.1} parent=1 // pred_check
      _
    $region3: #{nn_forward.1} parent=1 // pred_check_branch
      %16 = sbr.rel (0) target = $region5
    $region4: #{nn_forward.1} parent=1 // pred_region
      %s18 = ssub.s32 896, 896
      %19 = vsyncadd [#allocation3], %s18
      %s21 = sshll.u32 [#allocation2], 4
      %s22 = int_to_ptr.vmem [resolvable:$true] %s21
      %24 = dma.hbm_to_vmem [thread:$0]  %s0, 896, %s22, [#allocation3]
    $region5: #{nn_forward.1} parent=1 // pred_fallthru
      _
    // Predicated region
    $region6: #{nn_forward.1} parent=1 // pred_check
      _
    $region7: #{nn_forward.1} parent=1 // pred_check_branch
      %26 = sbr.rel (0) target = $region9
    $region8: #{nn_forward.1} parent=1 // pred_region
      %s28 = ssub.s32 50176, 50176
      %29 = vsyncadd [#allocation6], %s28
      %s30 = sshll.u32 [#allocation5], 4
      %s31 = int_to_ptr.vmem [resolvable:$true] %s30
      %36 = dma.hbm_to_vmem [thread:$0]  %s1, 50176, %s31, [#allocation6], 512, 512, 32
    $region9: #{nn_forward.1} parent=1 // pred_fallthru
      _
    // Predicated region
    $region10: #{nn_forward.1} parent=1 // pred_check
      _
    $region11: #{nn_forward.1} parent=1 // pred_check_branch
      %38 = sbr.rel (0) target = $region13
    $region12: #{nn_forward.1} parent=1 // pred_region
      _
    $region13: #{nn_forward.1} parent=1 // pred_fallthru
      _
    // Predicated region
    $region14: #{nn_forward.1} parent=1 // pred_check
      _
    $region15: #{nn_forward.1} parent=1 // pred_check_branch
      %40 = sbr.rel (0) target = $region17
    $region16: #{nn_forward.1} parent=1 // pred_region
      %41 = dma.done [#allocation3], 896
    $region17: #{nn_forward.1} parent=1 // pred_fallthru
      _
    // Predicated region
    $region18: #{nn_forward.1} parent=1 // pred_check
      _
    $region19: #{nn_forward.1} parent=1 // pred_check_branch
      %43 = sbr.rel (0) target = $region21
    $region20: #{nn_forward.1} parent=1 // pred_region
      %44 = dma.done [#allocation6], 50176
    $region21: #{nn_forward.1} parent=1 // pred_fallthru
      _
    %v45 = vld [vmem:[#allocation2] sm:$0xff]
    %v46 = vld [vmem:[#allocation2 + $0x8] sm:$0xff]
    %v47 = vld [vmem:[#allocation2 + $0x10] sm:$0xff]
    %v48 = vld [vmem:[#allocation2 + $0x18] sm:$0xff]
    %v49 = vld [vmem:[#allocation2 + $0x20] sm:$0xff]
    %v50 = vld [vmem:[#allocation2 + $0x28] sm:$0xff]
    %v51 = vld [vmem:[#allocation2 + $0x30] sm:$0xff]
    %v52 = vld [vmem:[#allocation5] sm:$0xff]
    %v53 = vld [vmem:[#allocation5 + $0x8] sm:$0xff]
    %v54 = vld [vmem:[#allocation5 + $0x10] sm:$0xff]
    %v55 = vld [vmem:[#allocation5 + $0x18] sm:$0xff]
    %v56 = vld [vmem:[#allocation5 + $0x20] sm:$0xff]
    %v57 = vld [vmem:[#allocation5 + $0x28] sm:$0xff]
    %v58 = vld [vmem:[#allocation5 + $0x30] sm:$0xff]
    %v59 = vld [vmem:[#allocation5 + $0x38] sm:$0xff]
    %v60 = vld [vmem:[#allocation5 + $0x40] sm:$0xff]
    %v61 = vld [vmem:[#allocation5 + $0x48] sm:$0xff]
    %v62 = vld [vmem:[#allocation5 + $0x50] sm:$0xff]
    %v63 = vld [vmem:[#allocation5 + $0x58] sm:$0xff]
    %v64 = vld [vmem:[#allocation5 + $0x60] sm:$0xff]
    %v65 = vld [vmem:[#allocation5 + $0x68] sm:$0xff]
    %v66 = vld [vmem:[#allocation5 + $0x70] sm:$0xff]
    %v67 = vld [vmem:[#allocation5 + $0x78] sm:$0xff]
    %v68 = vld [vmem:[#allocation5 + $0x80] sm:$0xff]
    %v69 = vld [vmem:[#allocation5 + $0x88] sm:$0xff]
    %v70 = vld [vmem:[#allocation5 + $0x90] sm:$0xff]
    %v71 = vld [vmem:[#allocation5 + $0x98] sm:$0xff]
    %v72 = vld [vmem:[#allocation5 + $0xa0] sm:$0xff]
    %v73 = vld [vmem:[#allocation5 + $0xa8] sm:$0xff]
    %v74 = vld [vmem:[#allocation5 + $0xb0] sm:$0xff]
    %v75 = vld [vmem:[#allocation5 + $0xb8] sm:$0xff]
    %v76 = vld [vmem:[#allocation5 + $0xc0] sm:$0xff]
    %v77 = vld [vmem:[#allocation5 + $0xc8] sm:$0xff]
    %v78 = vld [vmem:[#allocation5 + $0xd0] sm:$0xff]
    %v79 = vld [vmem:[#allocation5 + $0xd8] sm:$0xff]
    %v80 = vld [vmem:[#allocation5 + $0xe0] sm:$0xff]
    %v81 = vld [vmem:[#allocation5 + $0xe8] sm:$0xff]
    %v82 = vld [vmem:[#allocation5 + $0xf0] sm:$0xff]
    %v83 = vld [vmem:[#allocation5 + $0xf8] sm:$0xff]
    %v84 = vld [vmem:[#allocation5 + $0x100] sm:$0xff]
    %v85 = vld [vmem:[#allocation5 + $0x108] sm:$0xff]
    %v86 = vld [vmem:[#allocation5 + $0x110] sm:$0xff]
    %v87 = vld [vmem:[#allocation5 + $0x118] sm:$0xff]
    %v88 = vld [vmem:[#allocation5 + $0x120] sm:$0xff]
    %v89 = vld [vmem:[#allocation5 + $0x128] sm:$0xff]
    %v90 = vld [vmem:[#allocation5 + $0x130] sm:$0xff]
    %v91 = vld [vmem:[#allocation5 + $0x138] sm:$0xff]
    %v92 = vld [vmem:[#allocation5 + $0x140] sm:$0xff]
    %v93 = vld [vmem:[#allocation5 + $0x148] sm:$0xff]
    %v94 = vld [vmem:[#allocation5 + $0x150] sm:$0xff]
    %v95 = vld [vmem:[#allocation5 + $0x158] sm:$0xff]
    %v96 = vld [vmem:[#allocation5 + $0x160] sm:$0xff]
    %v97 = vld [vmem:[#allocation5 + $0x168] sm:$0xff]
    %v98 = vld [vmem:[#allocation5 + $0x170] sm:$0xff]
    %v99 = vld [vmem:[#allocation5 + $0x178] sm:$0xff]
    %v100 = vld [vmem:[#allocation5 + $0x180] sm:$0xff]
    %v101 = vld [vmem:[#allocation5 + $0x188] sm:$0xff]
    %v102 = vld [vmem:[#allocation5 + $0x190] sm:$0xff]
    %v103 = vld [vmem:[#allocation5 + $0x198] sm:$0xff]
    %v104 = vld [vmem:[#allocation5 + $0x1a0] sm:$0xff]
    %v105 = vld [vmem:[#allocation5 + $0x1a8] sm:$0xff]
    %v106 = vld [vmem:[#allocation5 + $0x1b0] sm:$0xff]
    %v107 = vld [vmem:[#allocation5 + $0x1b8] sm:$0xff]
    %v108 = vld [vmem:[#allocation5 + $0x1c0] sm:$0xff]
    %v109 = vld [vmem:[#allocation5 + $0x1c8] sm:$0xff]
    %v110 = vld [vmem:[#allocation5 + $0x1d0] sm:$0xff]
    %v111 = vld [vmem:[#allocation5 + $0x1d8] sm:$0xff]
    %v112 = vld [vmem:[#allocation5 + $0x1e0] sm:$0xff]
    %v113 = vld [vmem:[#allocation5 + $0x1e8] sm:$0xff]
    %v114 = vld [vmem:[#allocation5 + $0x1f0] sm:$0xff]
    %v115 = vld [vmem:[#allocation5 + $0x1f8] sm:$0xff]
    %v116 = vld [vmem:[#allocation5 + $0x200] sm:$0xff]
    %v117 = vld [vmem:[#allocation5 + $0x208] sm:$0xff]
    %v118 = vld [vmem:[#allocation5 + $0x210] sm:$0xff]
    %v119 = vld [vmem:[#allocation5 + $0x218] sm:$0xff]
    %v120 = vld [vmem:[#allocation5 + $0x220] sm:$0xff]
    %v121 = vld [vmem:[#allocation5 + $0x228] sm:$0xff]
    %v122 = vld [vmem:[#allocation5 + $0x230] sm:$0xff]
    %v123 = vld [vmem:[#allocation5 + $0x238] sm:$0xff]
    %v124 = vld [vmem:[#allocation5 + $0x240] sm:$0xff]
    %v125 = vld [vmem:[#allocation5 + $0x248] sm:$0xff]
    %v126 = vld [vmem:[#allocation5 + $0x250] sm:$0xff]
    %v127 = vld [vmem:[#allocation5 + $0x258] sm:$0xff]
    %v128 = vld [vmem:[#allocation5 + $0x260] sm:$0xff]
    %v129 = vld [vmem:[#allocation5 + $0x268] sm:$0xff]
    %v130 = vld [vmem:[#allocation5 + $0x270] sm:$0xff]
    %v131 = vld [vmem:[#allocation5 + $0x278] sm:$0xff]
    %v132 = vld [vmem:[#allocation5 + $0x280] sm:$0xff]
    %v133 = vld [vmem:[#allocation5 + $0x288] sm:$0xff]
    %v134 = vld [vmem:[#allocation5 + $0x290] sm:$0xff]
    %v135 = vld [vmem:[#allocation5 + $0x298] sm:$0xff]
    %v136 = vld [vmem:[#allocation5 + $0x2a0] sm:$0xff]
    %v137 = vld [vmem:[#allocation5 + $0x2a8] sm:$0xff]
    %v138 = vld [vmem:[#allocation5 + $0x2b0] sm:$0xff]
    %v139 = vld [vmem:[#allocation5 + $0x2b8] sm:$0xff]
    %v140 = vld [vmem:[#allocation5 + $0x2c0] sm:$0xff]
    %v141 = vld [vmem:[#allocation5 + $0x2c8] sm:$0xff]
    %v142 = vld [vmem:[#allocation5 + $0x2d0] sm:$0xff]
    %v143 = vld [vmem:[#allocation5 + $0x2d8] sm:$0xff]
    %v144 = vld [vmem:[#allocation5 + $0x2e0] sm:$0xff]
    %v145 = vld [vmem:[#allocation5 + $0x2e8] sm:$0xff]
    %v146 = vld [vmem:[#allocation5 + $0x2f0] sm:$0xff]
    %v147 = vld [vmem:[#allocation5 + $0x2f8] sm:$0xff]
    %v148 = vld [vmem:[#allocation5 + $0x300] sm:$0xff]
    %v149 = vld [vmem:[#allocation5 + $0x308] sm:$0xff]
    %v150 = vld [vmem:[#allocation5 + $0x310] sm:$0xff]
    %v151 = vld [vmem:[#allocation5 + $0x318] sm:$0xff]
    %v152 = vld [vmem:[#allocation5 + $0x320] sm:$0xff]
    %v153 = vld [vmem:[#allocation5 + $0x328] sm:$0xff]
    %v154 = vld [vmem:[#allocation5 + $0x330] sm:$0xff]
    %v155 = vld [vmem:[#allocation5 + $0x338] sm:$0xff]
    %v156 = vld [vmem:[#allocation5 + $0x340] sm:$0xff]
    %v157 = vld [vmem:[#allocation5 + $0x348] sm:$0xff]
    %v158 = vld [vmem:[#allocation5 + $0x350] sm:$0xff]
    %v159 = vld [vmem:[#allocation5 + $0x358] sm:$0xff]
    %v160 = vld [vmem:[#allocation5 + $0x360] sm:$0xff]
    %v161 = vld [vmem:[#allocation5 + $0x368] sm:$0xff]
    %v162 = vld [vmem:[#allocation5 + $0x370] sm:$0xff]
    %v163 = vld [vmem:[#allocation5 + $0x378] sm:$0xff]
    %v164 = vld [vmem:[#allocation5 + $0x380] sm:$0xff]
    %v165 = vld [vmem:[#allocation5 + $0x388] sm:$0xff]
    %v166 = vld [vmem:[#allocation5 + $0x390] sm:$0xff]
    %v167 = vld [vmem:[#allocation5 + $0x398] sm:$0xff]
    %v168 = vld [vmem:[#allocation5 + $0x3a0] sm:$0xff]
    %v169 = vld [vmem:[#allocation5 + $0x3a8] sm:$0xff]
    %v170 = vld [vmem:[#allocation5 + $0x3b0] sm:$0xff]
    %v171 = vld [vmem:[#allocation5 + $0x3b8] sm:$0xff]
    %v172 = vld [vmem:[#allocation5 + $0x3c0] sm:$0xff]
    %v173 = vld [vmem:[#allocation5 + $0x3c8] sm:$0xff]
    %v174 = vld [vmem:[#allocation5 + $0x3d0] sm:$0xff]
    %v175 = vld [vmem:[#allocation5 + $0x3d8] sm:$0xff]
    %v176 = vld [vmem:[#allocation5 + $0x3e0] sm:$0xff]
    %v177 = vld [vmem:[#allocation5 + $0x3e8] sm:$0xff]
    %v178 = vld [vmem:[#allocation5 + $0x3f0] sm:$0xff]
    %v179 = vld [vmem:[#allocation5 + $0x3f8] sm:$0xff]
    %v180 = vld [vmem:[#allocation5 + $0x400] sm:$0xff]
    %v181 = vld [vmem:[#allocation5 + $0x408] sm:$0xff]
    %v182 = vld [vmem:[#allocation5 + $0x410] sm:$0xff]
    %v183 = vld [vmem:[#allocation5 + $0x418] sm:$0xff]
    %v184 = vld [vmem:[#allocation5 + $0x420] sm:$0xff]
    %v185 = vld [vmem:[#allocation5 + $0x428] sm:$0xff]
    %v186 = vld [vmem:[#allocation5 + $0x430] sm:$0xff]
    %v187 = vld [vmem:[#allocation5 + $0x438] sm:$0xff]
    %v188 = vld [vmem:[#allocation5 + $0x440] sm:$0xff]
    %v189 = vld [vmem:[#allocation5 + $0x448] sm:$0xff]
    %v190 = vld [vmem:[#allocation5 + $0x450] sm:$0xff]
    %v191 = vld [vmem:[#allocation5 + $0x458] sm:$0xff]
    %v192 = vld [vmem:[#allocation5 + $0x460] sm:$0xff]
    %v193 = vld [vmem:[#allocation5 + $0x468] sm:$0xff]
    %v194 = vld [vmem:[#allocation5 + $0x470] sm:$0xff]
    %v195 = vld [vmem:[#allocation5 + $0x478] sm:$0xff]
    %v196 = vld [vmem:[#allocation5 + $0x480] sm:$0xff]
    %v197 = vld [vmem:[#allocation5 + $0x488] sm:$0xff]
    %v198 = vld [vmem:[#allocation5 + $0x490] sm:$0xff]
    %v199 = vld [vmem:[#allocation5 + $0x498] sm:$0xff]
    %v200 = vld [vmem:[#allocation5 + $0x4a0] sm:$0xff]
    %v201 = vld [vmem:[#allocation5 + $0x4a8] sm:$0xff]
    %v202 = vld [vmem:[#allocation5 + $0x4b0] sm:$0xff]
    %v203 = vld [vmem:[#allocation5 + $0x4b8] sm:$0xff]
    %v204 = vld [vmem:[#allocation5 + $0x4c0] sm:$0xff]
    %v205 = vld [vmem:[#allocation5 + $0x4c8] sm:$0xff]
    %v206 = vld [vmem:[#allocation5 + $0x4d0] sm:$0xff]
    %v207 = vld [vmem:[#allocation5 + $0x4d8] sm:$0xff]
    %v208 = vld [vmem:[#allocation5 + $0x4e0] sm:$0xff]
    %v209 = vld [vmem:[#allocation5 + $0x4e8] sm:$0xff]
    %v210 = vld [vmem:[#allocation5 + $0x4f0] sm:$0xff]
    %v211 = vld [vmem:[#allocation5 + $0x4f8] sm:$0xff]
    %v212 = vld [vmem:[#allocation5 + $0x500] sm:$0xff]
    %v213 = vld [vmem:[#allocation5 + $0x508] sm:$0xff]
    %v214 = vld [vmem:[#allocation5 + $0x510] sm:$0xff]
    %v215 = vld [vmem:[#allocation5 + $0x518] sm:$0xff]
    %v216 = vld [vmem:[#allocation5 + $0x520] sm:$0xff]
    %v217 = vld [vmem:[#allocation5 + $0x528] sm:$0xff]
    %v218 = vld [vmem:[#allocation5 + $0x530] sm:$0xff]
    %v219 = vld [vmem:[#allocation5 + $0x538] sm:$0xff]
    %v220 = vld [vmem:[#allocation5 + $0x540] sm:$0xff]
    %v221 = vld [vmem:[#allocation5 + $0x548] sm:$0xff]
    %v222 = vld [vmem:[#allocation5 + $0x550] sm:$0xff]
    %v223 = vld [vmem:[#allocation5 + $0x558] sm:$0xff]
    %v224 = vld [vmem:[#allocation5 + $0x560] sm:$0xff]
    %v225 = vld [vmem:[#allocation5 + $0x568] sm:$0xff]
    %v226 = vld [vmem:[#allocation5 + $0x570] sm:$0xff]
    %v227 = vld [vmem:[#allocation5 + $0x578] sm:$0xff]
    %v228 = vld [vmem:[#allocation5 + $0x580] sm:$0xff]
    %v229 = vld [vmem:[#allocation5 + $0x588] sm:$0xff]
    %v230 = vld [vmem:[#allocation5 + $0x590] sm:$0xff]
    %v231 = vld [vmem:[#allocation5 + $0x598] sm:$0xff]
    %v232 = vld [vmem:[#allocation5 + $0x5a0] sm:$0xff]
    %v233 = vld [vmem:[#allocation5 + $0x5a8] sm:$0xff]
    %v234 = vld [vmem:[#allocation5 + $0x5b0] sm:$0xff]
    %v235 = vld [vmem:[#allocation5 + $0x5b8] sm:$0xff]
    %v236 = vld [vmem:[#allocation5 + $0x5c0] sm:$0xff]
    %v237 = vld [vmem:[#allocation5 + $0x5c8] sm:$0xff]
    %v238 = vld [vmem:[#allocation5 + $0x5d0] sm:$0xff]
    %v239 = vld [vmem:[#allocation5 + $0x5d8] sm:$0xff]
    %v240 = vld [vmem:[#allocation5 + $0x5e0] sm:$0xff]
    %v241 = vld [vmem:[#allocation5 + $0x5e8] sm:$0xff]
    %v242 = vld [vmem:[#allocation5 + $0x5f0] sm:$0xff]
    %v243 = vld [vmem:[#allocation5 + $0x5f8] sm:$0xff]
    %v244 = vld [vmem:[#allocation5 + $0x600] sm:$0xff]
    %v245 = vld [vmem:[#allocation5 + $0x608] sm:$0xff]
    %v246 = vld [vmem:[#allocation5 + $0x610] sm:$0xff]
    %v247 = vld [vmem:[#allocation5 + $0x618] sm:$0xff]
    %v248 = vld [vmem:[#allocation5 + $0x620] sm:$0xff]
    %v249 = vld [vmem:[#allocation5 + $0x628] sm:$0xff]
    %v250 = vld [vmem:[#allocation5 + $0x630] sm:$0xff]
    %v251 = vld [vmem:[#allocation5 + $0x638] sm:$0xff]
    %v252 = vld [vmem:[#allocation5 + $0x640] sm:$0xff]
    %v253 = vld [vmem:[#allocation5 + $0x648] sm:$0xff]
    %v254 = vld [vmem:[#allocation5 + $0x650] sm:$0xff]
    %v255 = vld [vmem:[#allocation5 + $0x658] sm:$0xff]
    %v256 = vld [vmem:[#allocation5 + $0x660] sm:$0xff]
    %v257 = vld [vmem:[#allocation5 + $0x668] sm:$0xff]
    %v258 = vld [vmem:[#allocation5 + $0x670] sm:$0xff]
    %v259 = vld [vmem:[#allocation5 + $0x678] sm:$0xff]
    %v260 = vld [vmem:[#allocation5 + $0x680] sm:$0xff]
    %v261 = vld [vmem:[#allocation5 + $0x688] sm:$0xff]
    %v262 = vld [vmem:[#allocation5 + $0x690] sm:$0xff]
    %v263 = vld [vmem:[#allocation5 + $0x698] sm:$0xff]
    %v264 = vld [vmem:[#allocation5 + $0x6a0] sm:$0xff]
    %v265 = vld [vmem:[#allocation5 + $0x6a8] sm:$0xff]
    %v266 = vld [vmem:[#allocation5 + $0x6b0] sm:$0xff]
    %v267 = vld [vmem:[#allocation5 + $0x6b8] sm:$0xff]
    %v268 = vld [vmem:[#allocation5 + $0x6c0] sm:$0xff]
    %v269 = vld [vmem:[#allocation5 + $0x6c8] sm:$0xff]
    %v270 = vld [vmem:[#allocation5 + $0x6d0] sm:$0xff]
    %v271 = vld [vmem:[#allocation5 + $0x6d8] sm:$0xff]
    %v272 = vld [vmem:[#allocation5 + $0x6e0] sm:$0xff]
    %v273 = vld [vmem:[#allocation5 + $0x6e8] sm:$0xff]
    %v274 = vld [vmem:[#allocation5 + $0x6f0] sm:$0xff]
    %v275 = vld [vmem:[#allocation5 + $0x6f8] sm:$0xff]
    %v276 = vld [vmem:[#allocation5 + $0x700] sm:$0xff]
    %v277 = vld [vmem:[#allocation5 + $0x708] sm:$0xff]
    %v278 = vld [vmem:[#allocation5 + $0x710] sm:$0xff]
    %v279 = vld [vmem:[#allocation5 + $0x718] sm:$0xff]
    %v280 = vld [vmem:[#allocation5 + $0x720] sm:$0xff]
    %v281 = vld [vmem:[#allocation5 + $0x728] sm:$0xff]
    %v282 = vld [vmem:[#allocation5 + $0x730] sm:$0xff]
    %v283 = vld [vmem:[#allocation5 + $0x738] sm:$0xff]
    %v284 = vld [vmem:[#allocation5 + $0x740] sm:$0xff]
    %v285 = vld [vmem:[#allocation5 + $0x748] sm:$0xff]
    %v286 = vld [vmem:[#allocation5 + $0x750] sm:$0xff]
    %v287 = vld [vmem:[#allocation5 + $0x758] sm:$0xff]
    %v288 = vld [vmem:[#allocation5 + $0x760] sm:$0xff]
    %v289 = vld [vmem:[#allocation5 + $0x768] sm:$0xff]
    %v290 = vld [vmem:[#allocation5 + $0x770] sm:$0xff]
    %v291 = vld [vmem:[#allocation5 + $0x778] sm:$0xff]
    %v292 = vld [vmem:[#allocation5 + $0x780] sm:$0xff]
    %v293 = vld [vmem:[#allocation5 + $0x788] sm:$0xff]
    %v294 = vld [vmem:[#allocation5 + $0x790] sm:$0xff]
    %v295 = vld [vmem:[#allocation5 + $0x798] sm:$0xff]
    %v296 = vld [vmem:[#allocation5 + $0x7a0] sm:$0xff]
    %v297 = vld [vmem:[#allocation5 + $0x7a8] sm:$0xff]
    %v298 = vld [vmem:[#allocation5 + $0x7b0] sm:$0xff]
    %v299 = vld [vmem:[#allocation5 + $0x7b8] sm:$0xff]
    %v300 = vld [vmem:[#allocation5 + $0x7c0] sm:$0xff]
    %v301 = vld [vmem:[#allocation5 + $0x7c8] sm:$0xff]
    %v302 = vld [vmem:[#allocation5 + $0x7d0] sm:$0xff]
    %v303 = vld [vmem:[#allocation5 + $0x7d8] sm:$0xff]
    %v304 = vld [vmem:[#allocation5 + $0x7e0] sm:$0xff]
    %v305 = vld [vmem:[#allocation5 + $0x7e8] sm:$0xff]
    %v306 = vld [vmem:[#allocation5 + $0x7f0] sm:$0xff]
    %v307 = vld [vmem:[#allocation5 + $0x7f8] sm:$0xff]
    %v308 = vld [vmem:[#allocation5 + $0x800] sm:$0xff]
    %v309 = vld [vmem:[#allocation5 + $0x808] sm:$0xff]
    %v310 = vld [vmem:[#allocation5 + $0x810] sm:$0xff]
    %v311 = vld [vmem:[#allocation5 + $0x818] sm:$0xff]
    %v312 = vld [vmem:[#allocation5 + $0x820] sm:$0xff]
    %v313 = vld [vmem:[#allocation5 + $0x828] sm:$0xff]
    %v314 = vld [vmem:[#allocation5 + $0x830] sm:$0xff]
    %v315 = vld [vmem:[#allocation5 + $0x838] sm:$0xff]
    %v316 = vld [vmem:[#allocation5 + $0x840] sm:$0xff]
    %v317 = vld [vmem:[#allocation5 + $0x848] sm:$0xff]
    %v318 = vld [vmem:[#allocation5 + $0x850] sm:$0xff]
    %v319 = vld [vmem:[#allocation5 + $0x858] sm:$0xff]
    %v320 = vld [vmem:[#allocation5 + $0x860] sm:$0xff]
    %v321 = vld [vmem:[#allocation5 + $0x868] sm:$0xff]
    %v322 = vld [vmem:[#allocation5 + $0x870] sm:$0xff]
    %v323 = vld [vmem:[#allocation5 + $0x878] sm:$0xff]
    %v324 = vld [vmem:[#allocation5 + $0x880] sm:$0xff]
    %v325 = vld [vmem:[#allocation5 + $0x888] sm:$0xff]
    %v326 = vld [vmem:[#allocation5 + $0x890] sm:$0xff]
    %v327 = vld [vmem:[#allocation5 + $0x898] sm:$0xff]
    %v328 = vld [vmem:[#allocation5 + $0x8a0] sm:$0xff]
    %v329 = vld [vmem:[#allocation5 + $0x8a8] sm:$0xff]
    %v330 = vld [vmem:[#allocation5 + $0x8b0] sm:$0xff]
    %v331 = vld [vmem:[#allocation5 + $0x8b8] sm:$0xff]
    %v332 = vld [vmem:[#allocation5 + $0x8c0] sm:$0xff]
    %v333 = vld [vmem:[#allocation5 + $0x8c8] sm:$0xff]
    %v334 = vld [vmem:[#allocation5 + $0x8d0] sm:$0xff]
    %v335 = vld [vmem:[#allocation5 + $0x8d8] sm:$0xff]
    %v336 = vld [vmem:[#allocation5 + $0x8e0] sm:$0xff]
    %v337 = vld [vmem:[#allocation5 + $0x8e8] sm:$0xff]
    %v338 = vld [vmem:[#allocation5 + $0x8f0] sm:$0xff]
    %v339 = vld [vmem:[#allocation5 + $0x8f8] sm:$0xff]
    %v340 = vld [vmem:[#allocation5 + $0x900] sm:$0xff]
    %v341 = vld [vmem:[#allocation5 + $0x908] sm:$0xff]
    %v342 = vld [vmem:[#allocation5 + $0x910] sm:$0xff]
    %v343 = vld [vmem:[#allocation5 + $0x918] sm:$0xff]
    %v344 = vld [vmem:[#allocation5 + $0x920] sm:$0xff]
    %v345 = vld [vmem:[#allocation5 + $0x928] sm:$0xff]
    %v346 = vld [vmem:[#allocation5 + $0x930] sm:$0xff]
    %v347 = vld [vmem:[#allocation5 + $0x938] sm:$0xff]
    %v348 = vld [vmem:[#allocation5 + $0x940] sm:$0xff]
    %v349 = vld [vmem:[#allocation5 + $0x948] sm:$0xff]
    %v350 = vld [vmem:[#allocation5 + $0x950] sm:$0xff]
    %v351 = vld [vmem:[#allocation5 + $0x958] sm:$0xff]
    %v352 = vld [vmem:[#allocation5 + $0x960] sm:$0xff]
    %v353 = vld [vmem:[#allocation5 + $0x968] sm:$0xff]
    %v354 = vld [vmem:[#allocation5 + $0x970] sm:$0xff]
    %v355 = vld [vmem:[#allocation5 + $0x978] sm:$0xff]
    %v356 = vld [vmem:[#allocation5 + $0x980] sm:$0xff]
    %v357 = vld [vmem:[#allocation5 + $0x988] sm:$0xff]
    %v358 = vld [vmem:[#allocation5 + $0x990] sm:$0xff]
    %v359 = vld [vmem:[#allocation5 + $0x998] sm:$0xff]
    %v360 = vld [vmem:[#allocation5 + $0x9a0] sm:$0xff]
    %v361 = vld [vmem:[#allocation5 + $0x9a8] sm:$0xff]
    %v362 = vld [vmem:[#allocation5 + $0x9b0] sm:$0xff]
    %v363 = vld [vmem:[#allocation5 + $0x9b8] sm:$0xff]
    %v364 = vld [vmem:[#allocation5 + $0x9c0] sm:$0xff]
    %v365 = vld [vmem:[#allocation5 + $0x9c8] sm:$0xff]
    %v366 = vld [vmem:[#allocation5 + $0x9d0] sm:$0xff]
    %v367 = vld [vmem:[#allocation5 + $0x9d8] sm:$0xff]
    %v368 = vld [vmem:[#allocation5 + $0x9e0] sm:$0xff]
    %v369 = vld [vmem:[#allocation5 + $0x9e8] sm:$0xff]
    %v370 = vld [vmem:[#allocation5 + $0x9f0] sm:$0xff]
    %v371 = vld [vmem:[#allocation5 + $0x9f8] sm:$0xff]
    %v372 = vld [vmem:[#allocation5 + $0xa00] sm:$0xff]
    %v373 = vld [vmem:[#allocation5 + $0xa08] sm:$0xff]
    %v374 = vld [vmem:[#allocation5 + $0xa10] sm:$0xff]
    %v375 = vld [vmem:[#allocation5 + $0xa18] sm:$0xff]
    %v376 = vld [vmem:[#allocation5 + $0xa20] sm:$0xff]
    %v377 = vld [vmem:[#allocation5 + $0xa28] sm:$0xff]
    %v378 = vld [vmem:[#allocation5 + $0xa30] sm:$0xff]
    %v379 = vld [vmem:[#allocation5 + $0xa38] sm:$0xff]
    %v380 = vld [vmem:[#allocation5 + $0xa40] sm:$0xff]
    %v381 = vld [vmem:[#allocation5 + $0xa48] sm:$0xff]
    %v382 = vld [vmem:[#allocation5 + $0xa50] sm:$0xff]
    %v383 = vld [vmem:[#allocation5 + $0xa58] sm:$0xff]
    %v384 = vld [vmem:[#allocation5 + $0xa60] sm:$0xff]
    %v385 = vld [vmem:[#allocation5 + $0xa68] sm:$0xff]
    %v386 = vld [vmem:[#allocation5 + $0xa70] sm:$0xff]
    %v387 = vld [vmem:[#allocation5 + $0xa78] sm:$0xff]
    %v388 = vld [vmem:[#allocation5 + $0xa80] sm:$0xff]
    %v389 = vld [vmem:[#allocation5 + $0xa88] sm:$0xff]
    %v390 = vld [vmem:[#allocation5 + $0xa90] sm:$0xff]
    %v391 = vld [vmem:[#allocation5 + $0xa98] sm:$0xff]
    %v392 = vld [vmem:[#allocation5 + $0xaa0] sm:$0xff]
    %v393 = vld [vmem:[#allocation5 + $0xaa8] sm:$0xff]
    %v394 = vld [vmem:[#allocation5 + $0xab0] sm:$0xff]
    %v395 = vld [vmem:[#allocation5 + $0xab8] sm:$0xff]
    %v396 = vld [vmem:[#allocation5 + $0xac0] sm:$0xff]
    %v397 = vld [vmem:[#allocation5 + $0xac8] sm:$0xff]
    %v398 = vld [vmem:[#allocation5 + $0xad0] sm:$0xff]
    %v399 = vld [vmem:[#allocation5 + $0xad8] sm:$0xff]
    %v400 = vld [vmem:[#allocation5 + $0xae0] sm:$0xff]
    %v401 = vld [vmem:[#allocation5 + $0xae8] sm:$0xff]
    %v402 = vld [vmem:[#allocation5 + $0xaf0] sm:$0xff]
    %v403 = vld [vmem:[#allocation5 + $0xaf8] sm:$0xff]
    %v404 = vld [vmem:[#allocation5 + $0xb00] sm:$0xff]
    %v405 = vld [vmem:[#allocation5 + $0xb08] sm:$0xff]
    %v406 = vld [vmem:[#allocation5 + $0xb10] sm:$0xff]
    %v407 = vld [vmem:[#allocation5 + $0xb18] sm:$0xff]
    %v408 = vld [vmem:[#allocation5 + $0xb20] sm:$0xff]
    %v409 = vld [vmem:[#allocation5 + $0xb28] sm:$0xff]
    %v410 = vld [vmem:[#allocation5 + $0xb30] sm:$0xff]
    %v411 = vld [vmem:[#allocation5 + $0xb38] sm:$0xff]
    %v412 = vld [vmem:[#allocation5 + $0xb40] sm:$0xff]
    %v413 = vld [vmem:[#allocation5 + $0xb48] sm:$0xff]
    %v414 = vld [vmem:[#allocation5 + $0xb50] sm:$0xff]
    %v415 = vld [vmem:[#allocation5 + $0xb58] sm:$0xff]
    %v416 = vld [vmem:[#allocation5 + $0xb60] sm:$0xff]
    %v417 = vld [vmem:[#allocation5 + $0xb68] sm:$0xff]
    %v418 = vld [vmem:[#allocation5 + $0xb70] sm:$0xff]
    %v419 = vld [vmem:[#allocation5 + $0xb78] sm:$0xff]
    %v420 = vld [vmem:[#allocation5 + $0xb80] sm:$0xff]
    %v421 = vld [vmem:[#allocation5 + $0xb88] sm:$0xff]
    %v422 = vld [vmem:[#allocation5 + $0xb90] sm:$0xff]
    %v423 = vld [vmem:[#allocation5 + $0xb98] sm:$0xff]
    %v424 = vld [vmem:[#allocation5 + $0xba0] sm:$0xff]
    %v425 = vld [vmem:[#allocation5 + $0xba8] sm:$0xff]
    %v426 = vld [vmem:[#allocation5 + $0xbb0] sm:$0xff]
    %v427 = vld [vmem:[#allocation5 + $0xbb8] sm:$0xff]
    %v428 = vld [vmem:[#allocation5 + $0xbc0] sm:$0xff]
    %v429 = vld [vmem:[#allocation5 + $0xbc8] sm:$0xff]
    %v430 = vld [vmem:[#allocation5 + $0xbd0] sm:$0xff]
    %v431 = vld [vmem:[#allocation5 + $0xbd8] sm:$0xff]
    %v432 = vld [vmem:[#allocation5 + $0xbe0] sm:$0xff]
    %v433 = vld [vmem:[#allocation5 + $0xbe8] sm:$0xff]
    %v434 = vld [vmem:[#allocation5 + $0xbf0] sm:$0xff]
    %v435 = vld [vmem:[#allocation5 + $0xbf8] sm:$0xff]
    %v436 = vld [vmem:[#allocation5 + $0xc00] sm:$0xff]
    %v437 = vld [vmem:[#allocation5 + $0xc08] sm:$0xff]
    %v438 = vld [vmem:[#allocation5 + $0xc10] sm:$0xff]
    %v439 = vld [vmem:[#allocation5 + $0xc18] sm:$0xff]
    %v440 = vld [vmem:[#allocation5 + $0xc20] sm:$0xff]
    %v441 = vld [vmem:[#allocation5 + $0xc28] sm:$0xff]
    %v442 = vld [vmem:[#allocation5 + $0xc30] sm:$0xff]
    %v443 = vld [vmem:[#allocation5 + $0xc38] sm:$0xff]
    %vm444 = vcmask 130048
    %v446 = vsel %vm444, %v51, 0
    %448 = vmatprep.subr.mxu0 %v113
    %449 = vmatpush1.msra.mxu0 %v112
    %450 = vmatprep.subr.mxu0 %v109
    %451 = vmatpush1.msra.mxu0 %v108
    %452 = vmatprep.subr.mxu0 %v105
    %453 = vmatpush1.msra.mxu0 %v104
    %454 = vmatprep.subr.mxu0 %v101
    %455 = vmatpush1.msra.mxu0 %v100
    %456 = vmatprep.subr.mxu0 %v97
    %457 = vmatpush1.msra.mxu0 %v96
    %458 = vmatprep.subr.mxu0 %v93
    %459 = vmatpush1.msra.mxu0 %v92
    %460 = vmatprep.subr.mxu0 %v89
    %461 = vmatpush1.msra.mxu0 %v88
    %462 = vmatprep.subr.mxu0 %v85
    %463 = vmatpush1.msra.mxu0 %v84
    %464 = vmatprep.subr.mxu0 %v81
    %465 = vmatpush1.msra.mxu0 %v80
    %466 = vmatprep.subr.mxu0 %v77
    %467 = vmatpush1.msra.mxu0 %v76
    %468 = vmatprep.subr.mxu0 %v73
    %469 = vmatpush1.msra.mxu0 %v72
    %470 = vmatprep.subr.mxu0 %v69
    %471 = vmatpush1.msra.mxu0 %v68
    %472 = vmatprep.subr.mxu0 %v65
    %473 = vmatpush1.msra.mxu0 %v64
    %474 = vmatprep.subr.mxu0 %v61
    %475 = vmatpush1.msra.mxu0 %v60
    %476 = vmatprep.subr.mxu0 %v57
    %477 = vmatpush1.msra.mxu0 %v56
    %478 = vmatprep.subr.mxu0 %v53
    %479 = vmatpush1.msra.mxu0 %v52
    %480 = vmatprep.subr.mxu0 %v177
    %481 = vmatpush2.msra.mxu0 %v176
    %482 = vmatprep.subr.mxu0 %v173
    %483 = vmatpush2.msra.mxu0 %v172
    %484 = vmatprep.subr.mxu0 %v169
    %485 = vmatpush2.msra.mxu0 %v168
    %486 = vmatprep.subr.mxu0 %v165
    %487 = vmatpush2.msra.mxu0 %v164
    %488 = vmatprep.subr.mxu0 %v161
    %489 = vmatpush2.msra.mxu0 %v160
    %490 = vmatprep.subr.mxu0 %v157
    %491 = vmatpush2.msra.mxu0 %v156
    %492 = vmatprep.subr.mxu0 %v153
    %493 = vmatpush2.msra.mxu0 %v152
    %494 = vmatprep.subr.mxu0 %v149
    %495 = vmatpush2.msra.mxu0 %v148
    %496 = vmatprep.subr.mxu0 %v145
    %497 = vmatpush2.msra.mxu0 %v144
    %498 = vmatprep.subr.mxu0 %v141
    %499 = vmatpush2.msra.mxu0 %v140
    %500 = vmatprep.subr.mxu0 %v137
    %501 = vmatpush2.msra.mxu0 %v136
    %502 = vmatprep.subr.mxu0 %v133
    %503 = vmatpush2.msra.mxu0 %v132
    %504 = vmatprep.subr.mxu0 %v129
    %505 = vmatpush2.msra.mxu0 %v128
    %506 = vmatprep.subr.mxu0 %v125
    %507 = vmatpush2.msra.mxu0 %v124
    %508 = vmatprep.subr.mxu0 %v121
    %509 = vmatpush2.msra.mxu0 %v120
    %510 = vmatprep.subr.mxu0 %v117
    %511 = vmatpush2.msra.mxu0 %v116
    %512 = vmatprep.mubr.f32.mxu0 %v46
    %513 = vmatmul.mubr.f32.gmra.mxu0 %v45
    %v514 = vpop.f32.mrf.mxu0
    %v515 = vadd.f32 0.0, %v514
    %v516 = vpop.f32.mrf.mxu0
    %v517 = vadd.f32 0.0, %v516
    %518 = vdwg.mxu0
    %519 = vmatprep.subr.mxu0 %v241
    %520 = vmatpush1.msra.mxu0 %v240
    %521 = vmatprep.subr.mxu0 %v237
    %522 = vmatpush1.msra.mxu0 %v236
    %523 = vmatprep.subr.mxu0 %v233
    %524 = vmatpush1.msra.mxu0 %v232
    %525 = vmatprep.subr.mxu0 %v229
    %526 = vmatpush1.msra.mxu0 %v228
    %527 = vmatprep.subr.mxu0 %v225
    %528 = vmatpush1.msra.mxu0 %v224
    %529 = vmatprep.subr.mxu0 %v221
    %530 = vmatpush1.msra.mxu0 %v220
    %531 = vmatprep.subr.mxu0 %v217
    %532 = vmatpush1.msra.mxu0 %v216
    %533 = vmatprep.subr.mxu0 %v213
    %534 = vmatpush1.msra.mxu0 %v212
    %535 = vmatprep.subr.mxu0 %v209
    %536 = vmatpush1.msra.mxu0 %v208
    %537 = vmatprep.subr.mxu0 %v205
    %538 = vmatpush1.msra.mxu0 %v204
    %539 = vmatprep.subr.mxu0 %v201
    %540 = vmatpush1.msra.mxu0 %v200
    %541 = vmatprep.subr.mxu0 %v197
    %542 = vmatpush1.msra.mxu0 %v196
    %543 = vmatprep.subr.mxu0 %v193
    %544 = vmatpush1.msra.mxu0 %v192
    %545 = vmatprep.subr.mxu0 %v189
    %546 = vmatpush1.msra.mxu0 %v188
    %547 = vmatprep.subr.mxu0 %v185
    %548 = vmatpush1.msra.mxu0 %v184
    %549 = vmatprep.subr.mxu0 %v181
    %550 = vmatpush1.msra.mxu0 %v180
    %551 = vmatprep.subr.mxu0 %v305
    %552 = vmatpush2.msra.mxu0 %v304
    %553 = vmatprep.subr.mxu0 %v301
    %554 = vmatpush2.msra.mxu0 %v300
    %555 = vmatprep.subr.mxu0 %v297
    %556 = vmatpush2.msra.mxu0 %v296
    %557 = vmatprep.subr.mxu0 %v293
    %558 = vmatpush2.msra.mxu0 %v292
    %559 = vmatprep.subr.mxu0 %v289
    %560 = vmatpush2.msra.mxu0 %v288
    %561 = vmatprep.subr.mxu0 %v285
    %562 = vmatpush2.msra.mxu0 %v284
    %563 = vmatprep.subr.mxu0 %v281
    %564 = vmatpush2.msra.mxu0 %v280
    %565 = vmatprep.subr.mxu0 %v277
    %566 = vmatpush2.msra.mxu0 %v276
    %567 = vmatprep.subr.mxu0 %v273
    %568 = vmatpush2.msra.mxu0 %v272
    %569 = vmatprep.subr.mxu0 %v269
    %570 = vmatpush2.msra.mxu0 %v268
    %571 = vmatprep.subr.mxu0 %v265
    %572 = vmatpush2.msra.mxu0 %v264
    %573 = vmatprep.subr.mxu0 %v261
    %574 = vmatpush2.msra.mxu0 %v260
    %575 = vmatprep.subr.mxu0 %v257
    %576 = vmatpush2.msra.mxu0 %v256
    %577 = vmatprep.subr.mxu0 %v253
    %578 = vmatpush2.msra.mxu0 %v252
    %579 = vmatprep.subr.mxu0 %v249
    %580 = vmatpush2.msra.mxu0 %v248
    %581 = vmatprep.subr.mxu0 %v245
    %582 = vmatpush2.msra.mxu0 %v244
    %583 = vmatprep.mubr.f32.mxu0 %v48
    %584 = vmatmul.mubr.f32.gmra.mxu0 %v47
    %v585 = vpop.f32.mrf.mxu0
    %v586 = vadd.f32 %v515, %v585
    %v587 = vpop.f32.mrf.mxu0
    %v588 = vadd.f32 %v517, %v587
    %589 = vdwg.mxu0
    %590 = vmatprep.subr.mxu0 %v369
    %591 = vmatpush1.msra.mxu0 %v368
    %592 = vmatprep.subr.mxu0 %v365
    %593 = vmatpush1.msra.mxu0 %v364
    %594 = vmatprep.subr.mxu0 %v361
    %595 = vmatpush1.msra.mxu0 %v360
    %596 = vmatprep.subr.mxu0 %v357
    %597 = vmatpush1.msra.mxu0 %v356
    %598 = vmatprep.subr.mxu0 %v353
    %599 = vmatpush1.msra.mxu0 %v352
    %600 = vmatprep.subr.mxu0 %v349
    %601 = vmatpush1.msra.mxu0 %v348
    %602 = vmatprep.subr.mxu0 %v345
    %603 = vmatpush1.msra.mxu0 %v344
    %604 = vmatprep.subr.mxu0 %v341
    %605 = vmatpush1.msra.mxu0 %v340
    %606 = vmatprep.subr.mxu0 %v337
    %607 = vmatpush1.msra.mxu0 %v336
    %608 = vmatprep.subr.mxu0 %v333
    %609 = vmatpush1.msra.mxu0 %v332
    %610 = vmatprep.subr.mxu0 %v329
    %611 = vmatpush1.msra.mxu0 %v328
    %612 = vmatprep.subr.mxu0 %v325
    %613 = vmatpush1.msra.mxu0 %v324
    %614 = vmatprep.subr.mxu0 %v321
    %615 = vmatpush1.msra.mxu0 %v320
    %616 = vmatprep.subr.mxu0 %v317
    %617 = vmatpush1.msra.mxu0 %v316
    %618 = vmatprep.subr.mxu0 %v313
    %619 = vmatpush1.msra.mxu0 %v312
    %620 = vmatprep.subr.mxu0 %v309
    %621 = vmatpush1.msra.mxu0 %v308
    %622 = vmatprep.subr.mxu0 %v433
    %623 = vmatpush2.msra.mxu0 %v432
    %624 = vmatprep.subr.mxu0 %v429
    %625 = vmatpush2.msra.mxu0 %v428
    %626 = vmatprep.subr.mxu0 %v425
    %627 = vmatpush2.msra.mxu0 %v424
    %628 = vmatprep.subr.mxu0 %v421
    %629 = vmatpush2.msra.mxu0 %v420
    %630 = vmatprep.subr.mxu0 %v417
    %631 = vmatpush2.msra.mxu0 %v416
    %632 = vmatprep.subr.mxu0 %v413
    %633 = vmatpush2.msra.mxu0 %v412
    %634 = vmatprep.subr.mxu0 %v409
    %635 = vmatpush2.msra.mxu0 %v408
    %636 = vmatprep.subr.mxu0 %v405
    %637 = vmatpush2.msra.mxu0 %v404
    %638 = vmatprep.subr.mxu0 %v401
    %639 = vmatpush2.msra.mxu0 %v400
    %640 = vmatprep.subr.mxu0 %v397
    %641 = vmatpush2.msra.mxu0 %v396
    %642 = vmatprep.subr.mxu0 %v393
    %643 = vmatpush2.msra.mxu0 %v392
    %644 = vmatprep.subr.mxu0 %v389
    %645 = vmatpush2.msra.mxu0 %v388
    %646 = vmatprep.subr.mxu0 %v385
    %647 = vmatpush2.msra.mxu0 %v384
    %648 = vmatprep.subr.mxu0 %v381
    %649 = vmatpush2.msra.mxu0 %v380
    %650 = vmatprep.subr.mxu0 %v377
    %651 = vmatpush2.msra.mxu0 %v376
    %652 = vmatprep.subr.mxu0 %v373
    %653 = vmatpush2.msra.mxu0 %v372
    %654 = vmatprep.mubr.f32.mxu0 %v50
    %655 = vmatmul.mubr.f32.gmra.mxu0 %v49
    %v656 = vpop.f32.mrf.mxu0
    %v657 = vadd.f32 %v586, %v656
    %v658 = vpop.f32.mrf.mxu0
    %v659 = vadd.f32 %v588, %v658
    %660 = vdwg.mxu0
    %661 = vmatprep.subr.mxu0 0.0
    %662 = vmatpush1.msra.mxu0 0.0
    %663 = vmatprep.subr.mxu0 0.0
    %664 = vmatpush1.msra.mxu0 0.0
    %665 = vmatprep.subr.mxu0 0.0
    %666 = vmatpush1.msra.mxu0 0.0
    %667 = vmatprep.subr.mxu0 0.0
    %668 = vmatpush1.msra.mxu0 0.0
    %669 = vmatprep.subr.mxu0 0.0
    %670 = vmatpush1.msra.mxu0 0.0
    %671 = vmatprep.subr.mxu0 0.0
    %672 = vmatpush1.msra.mxu0 0.0
    %673 = vmatprep.subr.mxu0 0.0
    %674 = vmatpush1.msra.mxu0 0.0
    %675 = vmatprep.subr.mxu0 0.0
    %676 = vmatpush1.msra.mxu0 0.0
    %677 = vmatprep.subr.mxu0 0.0
    %678 = vmatpush1.msra.mxu0 0.0
    %679 = vmatprep.subr.mxu0 0.0
    %680 = vmatpush1.msra.mxu0 0.0
    %681 = vmatprep.subr.mxu0 0.0
    %682 = vmatpush1.msra.mxu0 0.0
    %683 = vmatprep.subr.mxu0 0.0
    %684 = vmatpush1.msra.mxu0 0.0
    %685 = vmatprep.subr.mxu0 0.0
    %686 = vmatpush1.msra.mxu0 0.0
    %687 = vmatprep.subr.mxu0 0.0
    %688 = vmatpush1.msra.mxu0 0.0
    %689 = vmatprep.subr.mxu0 %v441
    %690 = vmatpush1.msra.mxu0 %v440
    %691 = vmatprep.subr.mxu0 %v437
    %692 = vmatpush1.msra.mxu0 %v436
    %693 = vmatprep.subr.mxu0 0.0
    %694 = vmatpush2.msra.mxu0 0.0
    %695 = vmatprep.subr.mxu0 0.0
    %696 = vmatpush2.msra.mxu0 0.0
    %697 = vmatprep.subr.mxu0 0.0
    %698 = vmatpush2.msra.mxu0 0.0
    %699 = vmatprep.subr.mxu0 0.0
    %700 = vmatpush2.msra.mxu0 0.0
    %701 = vmatprep.subr.mxu0 0.0
    %702 = vmatpush2.msra.mxu0 0.0
    %703 = vmatprep.subr.mxu0 0.0
    %704 = vmatpush2.msra.mxu0 0.0
    %705 = vmatprep.subr.mxu0 0.0
    %706 = vmatpush2.msra.mxu0 0.0
    %707 = vmatprep.subr.mxu0 0.0
    %708 = vmatpush2.msra.mxu0 0.0
    %709 = vmatprep.subr.mxu0 0.0
    %710 = vmatpush2.msra.mxu0 0.0
    %711 = vmatprep.subr.mxu0 0.0
    %712 = vmatpush2.msra.mxu0 0.0
    %713 = vmatprep.subr.mxu0 0.0
    %714 = vmatpush2.msra.mxu0 0.0
    %715 = vmatprep.subr.mxu0 0.0
    %716 = vmatpush2.msra.mxu0 0.0
    %717 = vmatprep.subr.mxu0 0.0
    %718 = vmatpush2.msra.mxu0 0.0
    %719 = vmatprep.subr.mxu0 0.0
    %720 = vmatpush2.msra.mxu0 0.0
    %721 = vmatprep.subr.mxu0 0.0
    %722 = vmatpush2.msra.mxu0 0.0
    %723 = vmatprep.subr.mxu0 0.0
    %724 = vmatpush2.msra.mxu0 0.0
    %725 = vmatprep.mubr.f32.mxu0 0.0
    %726 = vmatmul.mubr.f32.gmra.mxu0 %v446
    %v727 = vpop.f32.mrf.mxu0
    %v728 = vadd.f32 %v657, %v727
    %v729 = vpop.f32.mrf.mxu0
    %v730 = vadd.f32 %v659, %v729
    %731 = vdwg.mxu0
    %732 = vmatprep.subr.mxu0 %v115
    %733 = vmatpush1.msra.mxu0 %v114
    %734 = vmatprep.subr.mxu0 %v111
    %735 = vmatpush1.msra.mxu0 %v110
    %736 = vmatprep.subr.mxu0 %v107
    %737 = vmatpush1.msra.mxu0 %v106
    %738 = vmatprep.subr.mxu0 %v103
    %739 = vmatpush1.msra.mxu0 %v102
    %740 = vmatprep.subr.mxu0 %v99
    %741 = vmatpush1.msra.mxu0 %v98
    %742 = vmatprep.subr.mxu0 %v95
    %743 = vmatpush1.msra.mxu0 %v94
    %744 = vmatprep.subr.mxu0 %v91
    %745 = vmatpush1.msra.mxu0 %v90
    %746 = vmatprep.subr.mxu0 %v87
    %747 = vmatpush1.msra.mxu0 %v86
    %748 = vmatprep.subr.mxu0 %v83
    %749 = vmatpush1.msra.mxu0 %v82
    %750 = vmatprep.subr.mxu0 %v79
    %751 = vmatpush1.msra.mxu0 %v78
    %752 = vmatprep.subr.mxu0 %v75
    %753 = vmatpush1.msra.mxu0 %v74
    %754 = vmatprep.subr.mxu0 %v71
    %755 = vmatpush1.msra.mxu0 %v70
    %756 = vmatprep.subr.mxu0 %v67
    %757 = vmatpush1.msra.mxu0 %v66
    %758 = vmatprep.subr.mxu0 %v63
    %759 = vmatpush1.msra.mxu0 %v62
    %760 = vmatprep.subr.mxu0 %v59
    %761 = vmatpush1.msra.mxu0 %v58
    %762 = vmatprep.subr.mxu0 %v55
    %763 = vmatpush1.msra.mxu0 %v54
    %764 = vmatprep.subr.mxu0 %v179
    %765 = vmatpush2.msra.mxu0 %v178
    %766 = vmatprep.subr.mxu0 %v175
    %767 = vmatpush2.msra.mxu0 %v174
    %768 = vmatprep.subr.mxu0 %v171
    %769 = vmatpush2.msra.mxu0 %v170
    %770 = vmatprep.subr.mxu0 %v167
    %771 = vmatpush2.msra.mxu0 %v166
    %772 = vmatprep.subr.mxu0 %v163
    %773 = vmatpush2.msra.mxu0 %v162
    %774 = vmatprep.subr.mxu0 %v159
    %775 = vmatpush2.msra.mxu0 %v158
    %776 = vmatprep.subr.mxu0 %v155
    %777 = vmatpush2.msra.mxu0 %v154
    %778 = vmatprep.subr.mxu0 %v151
    %779 = vmatpush2.msra.mxu0 %v150
    %780 = vmatprep.subr.mxu0 %v147
    %781 = vmatpush2.msra.mxu0 %v146
    %782 = vmatprep.subr.mxu0 %v143
    %783 = vmatpush2.msra.mxu0 %v142
    %784 = vmatprep.subr.mxu0 %v139
    %785 = vmatpush2.msra.mxu0 %v138
    %786 = vmatprep.subr.mxu0 %v135
    %787 = vmatpush2.msra.mxu0 %v134
    %788 = vmatprep.subr.mxu0 %v131
    %789 = vmatpush2.msra.mxu0 %v130
    %790 = vmatprep.subr.mxu0 %v127
    %791 = vmatpush2.msra.mxu0 %v126
    %792 = vmatprep.subr.mxu0 %v123
    %793 = vmatpush2.msra.mxu0 %v122
    %794 = vmatprep.subr.mxu0 %v119
    %795 = vmatpush2.msra.mxu0 %v118
    %796 = vmatprep.mubr.f32.mxu0 %v46
    %797 = vmatmul.mubr.f32.gmra.mxu0 %v45
    %v798 = vpop.f32.mrf.mxu0
    %v799 = vadd.f32 0.0, %v798
    %v800 = vpop.f32.mrf.mxu0
    %v801 = vadd.f32 0.0, %v800
    %802 = vdwg.mxu0
    %803 = vmatprep.subr.mxu0 %v243
    %804 = vmatpush1.msra.mxu0 %v242
    %805 = vmatprep.subr.mxu0 %v239
    %806 = vmatpush1.msra.mxu0 %v238
    %807 = vmatprep.subr.mxu0 %v235
    %808 = vmatpush1.msra.mxu0 %v234
    %809 = vmatprep.subr.mxu0 %v231
    %810 = vmatpush1.msra.mxu0 %v230
    %811 = vmatprep.subr.mxu0 %v227
    %812 = vmatpush1.msra.mxu0 %v226
    %813 = vmatprep.subr.mxu0 %v223
    %814 = vmatpush1.msra.mxu0 %v222
    %815 = vmatprep.subr.mxu0 %v219
    %816 = vmatpush1.msra.mxu0 %v218
    %817 = vmatprep.subr.mxu0 %v215
    %818 = vmatpush1.msra.mxu0 %v214
    %819 = vmatprep.subr.mxu0 %v211
    %820 = vmatpush1.msra.mxu0 %v210
    %821 = vmatprep.subr.mxu0 %v207
    %822 = vmatpush1.msra.mxu0 %v206
    %823 = vmatprep.subr.mxu0 %v203
    %824 = vmatpush1.msra.mxu0 %v202
    %825 = vmatprep.subr.mxu0 %v199
    %826 = vmatpush1.msra.mxu0 %v198
    %827 = vmatprep.subr.mxu0 %v195
    %828 = vmatpush1.msra.mxu0 %v194
    %829 = vmatprep.subr.mxu0 %v191
    %830 = vmatpush1.msra.mxu0 %v190
    %831 = vmatprep.subr.mxu0 %v187
    %832 = vmatpush1.msra.mxu0 %v186
    %833 = vmatprep.subr.mxu0 %v183
    %834 = vmatpush1.msra.mxu0 %v182
    %835 = vmatprep.subr.mxu0 %v307
    %836 = vmatpush2.msra.mxu0 %v306
    %837 = vmatprep.subr.mxu0 %v303
    %838 = vmatpush2.msra.mxu0 %v302
    %839 = vmatprep.subr.mxu0 %v299
    %840 = vmatpush2.msra.mxu0 %v298
    %841 = vmatprep.subr.mxu0 %v295
    %842 = vmatpush2.msra.mxu0 %v294
    %843 = vmatprep.subr.mxu0 %v291
    %844 = vmatpush2.msra.mxu0 %v290
    %845 = vmatprep.subr.mxu0 %v287
    %846 = vmatpush2.msra.mxu0 %v286
    %847 = vmatprep.subr.mxu0 %v283
    %848 = vmatpush2.msra.mxu0 %v282
    %849 = vmatprep.subr.mxu0 %v279
    %850 = vmatpush2.msra.mxu0 %v278
    %851 = vmatprep.subr.mxu0 %v275
    %852 = vmatpush2.msra.mxu0 %v274
    %853 = vmatprep.subr.mxu0 %v271
    %854 = vmatpush2.msra.mxu0 %v270
    %855 = vmatprep.subr.mxu0 %v267
    %856 = vmatpush2.msra.mxu0 %v266
    %857 = vmatprep.subr.mxu0 %v263
    %858 = vmatpush2.msra.mxu0 %v262
    %859 = vmatprep.subr.mxu0 %v259
    %860 = vmatpush2.msra.mxu0 %v258
    %861 = vmatprep.subr.mxu0 %v255
    %862 = vmatpush2.msra.mxu0 %v254
    %863 = vmatprep.subr.mxu0 %v251
    %864 = vmatpush2.msra.mxu0 %v250
    %865 = vmatprep.subr.mxu0 %v247
    %866 = vmatpush2.msra.mxu0 %v246
    %867 = vmatprep.mubr.f32.mxu0 %v48
    %868 = vmatmul.mubr.f32.gmra.mxu0 %v47
    %v869 = vpop.f32.mrf.mxu0
    %v870 = vadd.f32 %v799, %v869
    %v871 = vpop.f32.mrf.mxu0
    %v872 = vadd.f32 %v801, %v871
    %873 = vdwg.mxu0
    %874 = vmatprep.subr.mxu0 %v371
    %875 = vmatpush1.msra.mxu0 %v370
    %876 = vmatprep.subr.mxu0 %v367
    %877 = vmatpush1.msra.mxu0 %v366
    %878 = vmatprep.subr.mxu0 %v363
    %879 = vmatpush1.msra.mxu0 %v362
    %880 = vmatprep.subr.mxu0 %v359
    %881 = vmatpush1.msra.mxu0 %v358
    %882 = vmatprep.subr.mxu0 %v355
    %883 = vmatpush1.msra.mxu0 %v354
    %884 = vmatprep.subr.mxu0 %v351
    %885 = vmatpush1.msra.mxu0 %v350
    %886 = vmatprep.subr.mxu0 %v347
    %887 = vmatpush1.msra.mxu0 %v346
    %888 = vmatprep.subr.mxu0 %v343
    %889 = vmatpush1.msra.mxu0 %v342
    %890 = vmatprep.subr.mxu0 %v339
    %891 = vmatpush1.msra.mxu0 %v338
    %892 = vmatprep.subr.mxu0 %v335
    %893 = vmatpush1.msra.mxu0 %v334
    %894 = vmatprep.subr.mxu0 %v331
    %895 = vmatpush1.msra.mxu0 %v330
    %896 = vmatprep.subr.mxu0 %v327
    %897 = vmatpush1.msra.mxu0 %v326
    %898 = vmatprep.subr.mxu0 %v323
    %899 = vmatpush1.msra.mxu0 %v322
    %900 = vmatprep.subr.mxu0 %v319
    %901 = vmatpush1.msra.mxu0 %v318
    %902 = vmatprep.subr.mxu0 %v315
    %903 = vmatpush1.msra.mxu0 %v314
    %904 = vmatprep.subr.mxu0 %v311
    %905 = vmatpush1.msra.mxu0 %v310
    %906 = vmatprep.subr.mxu0 %v435
    %907 = vmatpush2.msra.mxu0 %v434
    %908 = vmatprep.subr.mxu0 %v431
    %909 = vmatpush2.msra.mxu0 %v430
    %910 = vmatprep.subr.mxu0 %v427
    %911 = vmatpush2.msra.mxu0 %v426
    %912 = vmatprep.subr.mxu0 %v423
    %913 = vmatpush2.msra.mxu0 %v422
    %914 = vmatprep.subr.mxu0 %v419
    %915 = vmatpush2.msra.mxu0 %v418
    %916 = vmatprep.subr.mxu0 %v415
    %917 = vmatpush2.msra.mxu0 %v414
    %918 = vmatprep.subr.mxu0 %v411
    %919 = vmatpush2.msra.mxu0 %v410
    %920 = vmatprep.subr.mxu0 %v407
    %921 = vmatpush2.msra.mxu0 %v406
    %922 = vmatprep.subr.mxu0 %v403
    %923 = vmatpush2.msra.mxu0 %v402
    %924 = vmatprep.subr.mxu0 %v399
    %925 = vmatpush2.msra.mxu0 %v398
    %926 = vmatprep.subr.mxu0 %v395
    %927 = vmatpush2.msra.mxu0 %v394
    %928 = vmatprep.subr.mxu0 %v391
    %929 = vmatpush2.msra.mxu0 %v390
    %930 = vmatprep.subr.mxu0 %v387
    %931 = vmatpush2.msra.mxu0 %v386
    %932 = vmatprep.subr.mxu0 %v383
    %933 = vmatpush2.msra.mxu0 %v382
    %934 = vmatprep.subr.mxu0 %v379
    %935 = vmatpush2.msra.mxu0 %v378
    %936 = vmatprep.subr.mxu0 %v375
    %937 = vmatpush2.msra.mxu0 %v374
    %938 = vmatprep.mubr.f32.mxu0 %v50
    %939 = vmatmul.mubr.f32.gmra.mxu0 %v49
    %v940 = vpop.f32.mrf.mxu0
    %v941 = vadd.f32 %v870, %v940
    %v942 = vpop.f32.mrf.mxu0
    %v943 = vadd.f32 %v872, %v942
    %944 = vdwg.mxu0
    %945 = vmatprep.subr.mxu0 0.0
    %946 = vmatpush1.msra.mxu0 0.0
    %947 = vmatprep.subr.mxu0 0.0
    %948 = vmatpush1.msra.mxu0 0.0
    %949 = vmatprep.subr.mxu0 0.0
    %950 = vmatpush1.msra.mxu0 0.0
    %951 = vmatprep.subr.mxu0 0.0
    %952 = vmatpush1.msra.mxu0 0.0
    %953 = vmatprep.subr.mxu0 0.0
    %954 = vmatpush1.msra.mxu0 0.0
    %955 = vmatprep.subr.mxu0 0.0
    %956 = vmatpush1.msra.mxu0 0.0
    %957 = vmatprep.subr.mxu0 0.0
    %958 = vmatpush1.msra.mxu0 0.0
    %959 = vmatprep.subr.mxu0 0.0
    %960 = vmatpush1.msra.mxu0 0.0
    %961 = vmatprep.subr.mxu0 0.0
    %962 = vmatpush1.msra.mxu0 0.0
    %963 = vmatprep.subr.mxu0 0.0
    %964 = vmatpush1.msra.mxu0 0.0
    %965 = vmatprep.subr.mxu0 0.0
    %966 = vmatpush1.msra.mxu0 0.0
    %967 = vmatprep.subr.mxu0 0.0
    %968 = vmatpush1.msra.mxu0 0.0
    %969 = vmatprep.subr.mxu0 0.0
    %970 = vmatpush1.msra.mxu0 0.0
    %971 = vmatprep.subr.mxu0 0.0
    %972 = vmatpush1.msra.mxu0 0.0
    %973 = vmatprep.subr.mxu0 %v443
    %974 = vmatpush1.msra.mxu0 %v442
    %975 = vmatprep.subr.mxu0 %v439
    %976 = vmatpush1.msra.mxu0 %v438
    %977 = vmatprep.subr.mxu0 0.0
    %978 = vmatpush2.msra.mxu0 0.0
    %979 = vmatprep.subr.mxu0 0.0
    %980 = vmatpush2.msra.mxu0 0.0
    %981 = vmatprep.subr.mxu0 0.0
    %982 = vmatpush2.msra.mxu0 0.0
    %983 = vmatprep.subr.mxu0 0.0
    %984 = vmatpush2.msra.mxu0 0.0
    %985 = vmatprep.subr.mxu0 0.0
    %986 = vmatpush2.msra.mxu0 0.0
    %987 = vmatprep.subr.mxu0 0.0
    %988 = vmatpush2.msra.mxu0 0.0
    %989 = vmatprep.subr.mxu0 0.0
    %990 = vmatpush2.msra.mxu0 0.0
    %991 = vmatprep.subr.mxu0 0.0
    %992 = vmatpush2.msra.mxu0 0.0
    %993 = vmatprep.subr.mxu0 0.0
    %994 = vmatpush2.msra.mxu0 0.0
    %995 = vmatprep.subr.mxu0 0.0
    %996 = vmatpush2.msra.mxu0 0.0
    %997 = vmatprep.subr.mxu0 0.0
    %998 = vmatpush2.msra.mxu0 0.0
    %999 = vmatprep.subr.mxu0 0.0
    %1000 = vmatpush2.msra.mxu0 0.0
    %1001 = vmatprep.subr.mxu0 0.0
    %1002 = vmatpush2.msra.mxu0 0.0
    %1003 = vmatprep.subr.mxu0 0.0
    %1004 = vmatpush2.msra.mxu0 0.0
    %1005 = vmatprep.subr.mxu0 0.0
    %1006 = vmatpush2.msra.mxu0 0.0
    %1007 = vmatprep.subr.mxu0 0.0
    %1008 = vmatpush2.msra.mxu0 0.0
    %1009 = vmatprep.mubr.f32.mxu0 0.0
    %1010 = vmatmul.mubr.f32.gmra.mxu0 %v446
    %v1011 = vpop.f32.mrf.mxu0
    %v1012 = vadd.f32 %v941, %v1011
    %v1013 = vpop.f32.mrf.mxu0
    %v1014 = vadd.f32 %v943, %v1013
    %1015 = vdwg.mxu0
    %v1016 = vmax.f32 %v728, 0.0
    %v1017 = vmax.f32 %v730, 0.0
    %v1018 = vmax.f32 %v1012, 0.0
    %v1019 = vmax.f32 %v1014, 0.0
    %1020 = vst [vmem:[#allocation7] sm:$0xff] %v728
    %1021 = vst [vmem:[#allocation7 + $0x8] sm:$0xff] %v730
    %1022 = vst [vmem:[#allocation7 + $0x10] sm:$0xff] %v1012
    %vm1023 = vcmask 949248
    %1024 = vst.msk [vmem:[#allocation7 + $0x18] sm:$0xff] %vm1023, %v1014
    %1025 = vst [vmem:[#allocation8] sm:$0xff] %v1016
    %1026 = vst [vmem:[#allocation8 + $0x8] sm:$0xff] %v1017
    %1027 = vst [vmem:[#allocation8 + $0x10] sm:$0xff] %v1018
    %1028 = vst.msk [vmem:[#allocation8 + $0x18] sm:$0xff] %vm1023, %v1019
    %v1029 = vld [vmem:[%s2] sm:$0xff]
    %v1030 = vld [vmem:[%s2 + $0x8] sm:$0xff]
    %v1031 = vld [vmem:[%s2 + $0x10] sm:$0xff]
    %v1032 = vld [vmem:[%s2 + $0x18] sm:$0xff]
    %v1033 = vld [vmem:[%s2 + $0x20] sm:$0xff]
    %v1034 = vld [vmem:[%s2 + $0x28] sm:$0xff]
    %v1035 = vld [vmem:[%s2 + $0x30] sm:$0xff]
    %v1036 = vld [vmem:[%s2 + $0x38] sm:$0xff]
    %v1037 = vld [vmem:[%s2 + $0x40] sm:$0xff]
    %v1038 = vld [vmem:[%s2 + $0x48] sm:$0xff]
    %v1039 = vld [vmem:[%s2 + $0x50] sm:$0xff]
    %v1040 = vld [vmem:[%s2 + $0x58] sm:$0xff]
    %v1041 = vld [vmem:[%s2 + $0x60] sm:$0xff]
    %v1042 = vld [vmem:[%s2 + $0x68] sm:$0xff]
    %v1043 = vld [vmem:[%s2 + $0x70] sm:$0xff]
    %v1044 = vld [vmem:[%s2 + $0x78] sm:$0xff]
    %v1045 = vld [vmem:[%s2 + $0x80] sm:$0xff]
    %v1046 = vld [vmem:[%s2 + $0x88] sm:$0xff]
    %v1047 = vld [vmem:[%s2 + $0x90] sm:$0xff]
    %v1048 = vld [vmem:[%s2 + $0x98] sm:$0xff]
    %v1049 = vld [vmem:[%s2 + $0xa0] sm:$0xff]
    %v1050 = vld [vmem:[%s2 + $0xa8] sm:$0xff]
    %v1051 = vld [vmem:[%s2 + $0xb0] sm:$0xff]
    %v1052 = vld [vmem:[%s2 + $0xb8] sm:$0xff]
    %v1053 = vld [vmem:[%s2 + $0xc0] sm:$0xff]
    %v1054 = vld [vmem:[%s2 + $0xc8] sm:$0xff]
    %v1055 = vld [vmem:[%s2 + $0xd0] sm:$0xff]
    %v1056 = vld [vmem:[%s2 + $0xd8] sm:$0xff]
    %v1057 = vld [vmem:[%s2 + $0xe0] sm:$0xff]
    %v1058 = vld [vmem:[%s2 + $0xe8] sm:$0xff]
    %v1059 = vld [vmem:[%s2 + $0xf0] sm:$0xff]
    %v1060 = vld [vmem:[%s2 + $0xf8] sm:$0xff]
    %v1061 = vld [vmem:[%s2 + $0x100] sm:$0xff]
    %v1062 = vld [vmem:[%s2 + $0x108] sm:$0xff]
    %v1063 = vld [vmem:[%s2 + $0x110] sm:$0xff]
    %v1064 = vld [vmem:[%s2 + $0x118] sm:$0xff]
    %v1065 = vld [vmem:[%s2 + $0x120] sm:$0xff]
    %v1066 = vld [vmem:[%s2 + $0x128] sm:$0xff]
    %v1067 = vld [vmem:[%s2 + $0x130] sm:$0xff]
    %v1068 = vld [vmem:[%s2 + $0x138] sm:$0xff]
    %v1069 = vld [vmem:[%s2 + $0x140] sm:$0xff]
    %v1070 = vld [vmem:[%s2 + $0x148] sm:$0xff]
    %v1071 = vld [vmem:[%s2 + $0x150] sm:$0xff]
    %v1072 = vld [vmem:[%s2 + $0x158] sm:$0xff]
    %v1073 = vld [vmem:[%s2 + $0x160] sm:$0xff]
    %v1074 = vld [vmem:[%s2 + $0x168] sm:$0xff]
    %v1075 = vld [vmem:[%s2 + $0x170] sm:$0xff]
    %v1076 = vld [vmem:[%s2 + $0x178] sm:$0xff]
    %v1077 = vld [vmem:[%s2 + $0x180] sm:$0xff]
    %v1078 = vld [vmem:[%s2 + $0x188] sm:$0xff]
    %v1079 = vld [vmem:[%s2 + $0x190] sm:$0xff]
    %v1080 = vld [vmem:[%s2 + $0x198] sm:$0xff]
    %v1081 = vld [vmem:[%s2 + $0x1a0] sm:$0xff]
    %v1082 = vld [vmem:[%s2 + $0x1a8] sm:$0xff]
    %v1083 = vld [vmem:[%s2 + $0x1b0] sm:$0xff]
    %v1084 = vld [vmem:[%s2 + $0x1b8] sm:$0xff]
    %v1085 = vld [vmem:[%s2 + $0x1c0] sm:$0xff]
    %v1086 = vld [vmem:[%s2 + $0x1c8] sm:$0xff]
    %v1087 = vld [vmem:[%s2 + $0x1d0] sm:$0xff]
    %v1088 = vld [vmem:[%s2 + $0x1d8] sm:$0xff]
    %v1089 = vld [vmem:[%s2 + $0x1e0] sm:$0xff]
    %v1090 = vld [vmem:[%s2 + $0x1e8] sm:$0xff]
    %v1091 = vld [vmem:[%s2 + $0x1f0] sm:$0xff]
    %v1092 = vld [vmem:[%s2 + $0x1f8] sm:$0xff]
    %1093 = vmatprep.subr.mxu0 0.0
    %1094 = vmatpush1.msra.mxu0 %v1044
    %1095 = vmatprep.subr.mxu0 0.0
    %1096 = vmatpush1.msra.mxu0 %v1043
    %1097 = vmatprep.subr.mxu0 0.0
    %1098 = vmatpush1.msra.mxu0 %v1042
    %1099 = vmatprep.subr.mxu0 0.0
    %1100 = vmatpush1.msra.mxu0 %v1041
    %1101 = vmatprep.subr.mxu0 0.0
    %1102 = vmatpush1.msra.mxu0 %v1040
    %1103 = vmatprep.subr.mxu0 0.0
    %1104 = vmatpush1.msra.mxu0 %v1039
    %1105 = vmatprep.subr.mxu0 0.0
    %1106 = vmatpush1.msra.mxu0 %v1038
    %1107 = vmatprep.subr.mxu0 0.0
    %1108 = vmatpush1.msra.mxu0 %v1037
    %1109 = vmatprep.subr.mxu0 0.0
    %1110 = vmatpush1.msra.mxu0 %v1036
    %1111 = vmatprep.subr.mxu0 0.0
    %1112 = vmatpush1.msra.mxu0 %v1035
    %1113 = vmatprep.subr.mxu0 0.0
    %1114 = vmatpush1.msra.mxu0 %v1034
    %1115 = vmatprep.subr.mxu0 0.0
    %1116 = vmatpush1.msra.mxu0 %v1033
    %1117 = vmatprep.subr.mxu0 0.0
    %1118 = vmatpush1.msra.mxu0 %v1032
    %1119 = vmatprep.subr.mxu0 0.0
    %1120 = vmatpush1.msra.mxu0 %v1031
    %1121 = vmatprep.subr.mxu0 0.0
    %1122 = vmatpush1.msra.mxu0 %v1030
    %1123 = vmatprep.subr.mxu0 0.0
    %1124 = vmatpush1.msra.mxu0 %v1029
    %1125 = vmatprep.subr.mxu0 0.0
    %1126 = vmatpush2.msra.mxu0 %v1060
    %1127 = vmatprep.subr.mxu0 0.0
    %1128 = vmatpush2.msra.mxu0 %v1059
    %1129 = vmatprep.subr.mxu0 0.0
    %1130 = vmatpush2.msra.mxu0 %v1058
    %1131 = vmatprep.subr.mxu0 0.0
    %1132 = vmatpush2.msra.mxu0 %v1057
    %1133 = vmatprep.subr.mxu0 0.0
    %1134 = vmatpush2.msra.mxu0 %v1056
    %1135 = vmatprep.subr.mxu0 0.0
    %1136 = vmatpush2.msra.mxu0 %v1055
    %1137 = vmatprep.subr.mxu0 0.0
    %1138 = vmatpush2.msra.mxu0 %v1054
    %1139 = vmatprep.subr.mxu0 0.0
    %1140 = vmatpush2.msra.mxu0 %v1053
    %1141 = vmatprep.subr.mxu0 0.0
    %1142 = vmatpush2.msra.mxu0 %v1052
    %1143 = vmatprep.subr.mxu0 0.0
    %1144 = vmatpush2.msra.mxu0 %v1051
    %1145 = vmatprep.subr.mxu0 0.0
    %1146 = vmatpush2.msra.mxu0 %v1050
    %1147 = vmatprep.subr.mxu0 0.0
    %1148 = vmatpush2.msra.mxu0 %v1049
    %1149 = vmatprep.subr.mxu0 0.0
    %1150 = vmatpush2.msra.mxu0 %v1048
    %1151 = vmatprep.subr.mxu0 0.0
    %1152 = vmatpush2.msra.mxu0 %v1047
    %1153 = vmatprep.subr.mxu0 0.0
    %1154 = vmatpush2.msra.mxu0 %v1046
    %1155 = vmatprep.subr.mxu0 0.0
    %1156 = vmatpush2.msra.mxu0 %v1045
    %1157 = vmatprep.mubr.f32.mxu0 %v1017
    %1158 = vmatmul.mubr.f32.gmra.mxu0 %v1016
    %v1159 = vpop.f32.mrf.mxu0
    %v1160 = vadd.f32 0.0, %v1159
    %v1161 = vpop.f32.mrf.mxu0
    %1162 = vdwg.mxu0
    %1163 = vmatprep.subr.mxu0 0.0
    %1164 = vmatpush1.msra.mxu0 %v1076
    %1165 = vmatprep.subr.mxu0 0.0
    %1166 = vmatpush1.msra.mxu0 %v1075
    %1167 = vmatprep.subr.mxu0 0.0
    %1168 = vmatpush1.msra.mxu0 %v1074
    %1169 = vmatprep.subr.mxu0 0.0
    %1170 = vmatpush1.msra.mxu0 %v1073
    %1171 = vmatprep.subr.mxu0 0.0
    %1172 = vmatpush1.msra.mxu0 %v1072
    %1173 = vmatprep.subr.mxu0 0.0
    %1174 = vmatpush1.msra.mxu0 %v1071
    %1175 = vmatprep.subr.mxu0 0.0
    %1176 = vmatpush1.msra.mxu0 %v1070
    %1177 = vmatprep.subr.mxu0 0.0
    %1178 = vmatpush1.msra.mxu0 %v1069
    %1179 = vmatprep.subr.mxu0 0.0
    %1180 = vmatpush1.msra.mxu0 %v1068
    %1181 = vmatprep.subr.mxu0 0.0
    %1182 = vmatpush1.msra.mxu0 %v1067
    %1183 = vmatprep.subr.mxu0 0.0
    %1184 = vmatpush1.msra.mxu0 %v1066
    %1185 = vmatprep.subr.mxu0 0.0
    %1186 = vmatpush1.msra.mxu0 %v1065
    %1187 = vmatprep.subr.mxu0 0.0
    %1188 = vmatpush1.msra.mxu0 %v1064
    %1189 = vmatprep.subr.mxu0 0.0
    %1190 = vmatpush1.msra.mxu0 %v1063
    %1191 = vmatprep.subr.mxu0 0.0
    %1192 = vmatpush1.msra.mxu0 %v1062
    %1193 = vmatprep.subr.mxu0 0.0
    %1194 = vmatpush1.msra.mxu0 %v1061
    %1195 = vmatprep.subr.mxu0 0.0
    %1196 = vmatpush2.msra.mxu0 %v1092
    %1197 = vmatprep.subr.mxu0 0.0
    %1198 = vmatpush2.msra.mxu0 %v1091
    %1199 = vmatprep.subr.mxu0 0.0
    %1200 = vmatpush2.msra.mxu0 %v1090
    %1201 = vmatprep.subr.mxu0 0.0
    %1202 = vmatpush2.msra.mxu0 %v1089
    %1203 = vmatprep.subr.mxu0 0.0
    %1204 = vmatpush2.msra.mxu0 %v1088
    %1205 = vmatprep.subr.mxu0 0.0
    %1206 = vmatpush2.msra.mxu0 %v1087
    %1207 = vmatprep.subr.mxu0 0.0
    %1208 = vmatpush2.msra.mxu0 %v1086
    %1209 = vmatprep.subr.mxu0 0.0
    %1210 = vmatpush2.msra.mxu0 %v1085
    %1211 = vmatprep.subr.mxu0 0.0
    %1212 = vmatpush2.msra.mxu0 %v1084
    %1213 = vmatprep.subr.mxu0 0.0
    %1214 = vmatpush2.msra.mxu0 %v1083
    %1215 = vmatprep.subr.mxu0 0.0
    %1216 = vmatpush2.msra.mxu0 %v1082
    %1217 = vmatprep.subr.mxu0 0.0
    %1218 = vmatpush2.msra.mxu0 %v1081
    %1219 = vmatprep.subr.mxu0 0.0
    %1220 = vmatpush2.msra.mxu0 %v1080
    %1221 = vmatprep.subr.mxu0 0.0
    %1222 = vmatpush2.msra.mxu0 %v1079
    %1223 = vmatprep.subr.mxu0 0.0
    %1224 = vmatpush2.msra.mxu0 %v1078
    %1225 = vmatprep.subr.mxu0 0.0
    %1226 = vmatpush2.msra.mxu0 %v1077
    %1227 = vmatprep.mubr.f32.mxu0 %v1019
    %1228 = vmatmul.mubr.f32.gmra.mxu0 %v1018
    %v1229 = vpop.f32.mrf.mxu0
    %v1230 = vadd.f32 %v1160, %v1229
    %v1231 = vpop.f32.mrf.mxu0
    %1232 = vdwg.mxu0
    %vm1233 = vcmask 80896
    %1234 = vst.msk [vmem:[#allocation10] sm:$0xff] %vm1233, %v1230
    // Predicated region
    $region22: #{nn_forward.1} parent=1 // pred_check
      _
    $region23: #{nn_forward.1} parent=1 // pred_check_branch
      %1236 = sbr.rel (0) target = $region25
    $region24: #{nn_forward.1} parent=1 // pred_region
      %s1238 = ssub.s32 512, 512
      %1239 = vsyncadd [#allocation4], %s1238
      %s1241 = sshll.u32 [#allocation7], 4
      %s1242 = int_to_ptr.vmem [resolvable:$true] %s1241
      %1244 = dma.vmem_to_hbm [thread:$0]  %s1242, 512, %s3, [#allocation4]
    $region25: #{nn_forward.1} parent=1 // pred_fallthru
      _
    // Predicated region
    $region26: #{nn_forward.1} parent=1 // pred_check
      _
    $region27: #{nn_forward.1} parent=1 // pred_check_branch
      %1246 = sbr.rel (0) target = $region29
    $region28: #{nn_forward.1} parent=1 // pred_region
      %s1248 = ssub.s32 512, 512
      %1249 = vsyncadd [#allocation9], %s1248
      %s1251 = sshll.u32 [#allocation8], 4
      %s1252 = int_to_ptr.vmem [resolvable:$true] %s1251
      %1254 = dma.vmem_to_hbm [thread:$0]  %s1252, 512, %s4, [#allocation9]
    $region29: #{nn_forward.1} parent=1 // pred_fallthru
      _
    // Predicated region
    $region30: #{nn_forward.1} parent=1 // pred_check
      _
    $region31: #{nn_forward.1} parent=1 // pred_check_branch
      %1256 = sbr.rel (0) target = $region33
    $region32: #{nn_forward.1} parent=1 // pred_region
      %s1258 = ssub.s32 128, 128
      %1259 = vsyncadd [#allocation9], %s1258
      %s1261 = sshll.u32 [#allocation10], 4
      %s1262 = int_to_ptr.vmem [resolvable:$true] %s1261
      %1264 = dma.vmem_to_hbm [thread:$0]  %s1262, 128, %s5, [#allocation9]
    $region33: #{nn_forward.1} parent=1 // pred_fallthru
      _
    // Predicated region
    $region34: #{nn_forward.1} parent=1 // pred_check
      _
    $region35: #{nn_forward.1} parent=1 // pred_check_branch
      %1266 = sbr.rel (0) target = $region37
    $region36: #{nn_forward.1} parent=1 // pred_region
      %1267 = dma.done [#allocation4], 512
    $region37: #{nn_forward.1} parent=1 // pred_fallthru
      _
    // Predicated region
    $region38: #{nn_forward.1} parent=1 // pred_check
      _
    $region39: #{nn_forward.1} parent=1 // pred_check_branch
      %1269 = sbr.rel (0) target = $region41
    $region40: #{nn_forward.1} parent=1 // pred_region
      %1270 = dma.done [#allocation9], 512
    $region41: #{nn_forward.1} parent=1 // pred_fallthru
      _
    // Predicated region
    $region42: #{nn_forward.1} parent=1 // pred_check
      _
    $region43: #{nn_forward.1} parent=1 // pred_check_branch
      %1272 = sbr.rel (0) target = $region45
    $region44: #{nn_forward.1} parent=1 // pred_region
      %1273 = dma.done [#allocation9], 128
    $region45: #{nn_forward.1} parent=1 // pred_fallthru
      _
    %1274 = vsyncpa [#allocation3], 1
    %1275 = vsyncpa [#allocation6], 1
    %1276 = vsyncpa [#allocation4], 1
    %1277 = vsyncpa [#allocation9], 1

</llo_original>
